<compile_context>
chip_gen: v6e
topology: v6e:2x2x1
jax: 0.10.0
libtpu: 0.0.40
codegen_flags: <defaults>
</compile_context>

<pallas_src>
import functools
import math

import jax
import jax.numpy as jnp
from jax import lax
from jax.experimental import pallas as pl
from jax.experimental.pallas import tpu as pltpu

EPS = 1e-5


def _fused_dsconv_kernel(x_ref, wdw_ref, wpw_ref, s1_ref, b1_ref, s2_ref, b2_ref,
                         o_ref, *, k, nb, th, wop, c, cout):
    # x_ref  : (NB, Hp, Wp*C)       padded input rows, lane-flat (w-major, c-minor)
    # wdw_ref: (k*k, WoP*C)         depthwise tap weights, lane-tiled
    # wpw_ref: (WoP*C, WoP*Cout)    block-diagonal 1x1-conv weight (128-mult lanes)
    # s1/b1  : (1, WoP*C)           folded conv1 bias + BN1 (eval) scale / shift
    # s2/b2  : (1, WoP*Cout)        folded conv2 bias + BN2 (eval) scale / shift
    # o_ref  : (NB, TH, WoP*Cout)   lane-dense output rows (full 128-lane stores)
    lanes_in = wop * c
    lanes_out = wop * cout
    row0 = pl.multiple_of(pl.program_id(1) * th, 8)       # TH is a multiple of 8

    # Hoist the small constant operands once per grid step.
    wpw = wpw_ref[...]
    s1, b1 = s1_ref[...], b1_ref[...]
    s2, b2 = s2_ref[...], b2_ref[...]
    # Pre-broadcast the k*k taps once (JAX does not CSE broadcast_in_dim).
    taps = [jnp.broadcast_to(wdw_ref[i, :], (th, lanes_in)) for i in range(k * k)]

    ys = []
    for b in range(nb):                                   # static unroll, NB small
        x_win = x_ref[b, pl.ds(row0, th + k - 1), :]      # (TH+k-1, Wp*C)
        # k lane-shifted views, hoisted out of the dy loop (k XLU shifts, not k*k).
        shifted = [x_win[:, dx * c: dx * c + lanes_in] for dx in range(k)]
        acc = jnp.zeros((th, lanes_in), jnp.float32)
        for dy in range(k):
            for dx in range(k):
                acc = acc + shifted[dx][dy:dy + th, :] * taps[dy * k + dx]
        ys.append(jnp.maximum(acc * s1 + b1, 0.0))        # BN1 (eval) + ReLU

    y = ys[0] if nb == 1 else jnp.concatenate(ys, axis=0)     # (NB*TH, WoP*C)
    # Pointwise 1x1 conv fused in: one MXU matmul against the block-diag weight.
    # (precision=lax.Precision.HIGHEST available here if tighter accuracy needed)
    z = jnp.dot(y, wpw, preferred_element_type=jnp.float32)   # (NB*TH, WoP*Cout)
    z = jnp.maximum(z * s2 + b2, 0.0)                         # BN2 (eval) + ReLU
    o_ref[...] = z.reshape(nb, th, lanes_out).astype(o_ref.dtype)


def _round_up(x, m):
    return (x + m - 1) // m * m


def _row_tile(hop, row_bytes, target=1 << 20):
    """Largest multiple-of-8 divisor of `hop` whose output tile <= target bytes."""
    best = 8 if hop % 8 == 0 else hop
    for t in range(8, hop + 1, 8):
        if hop % t == 0 and t * row_bytes <= target:
            best = t
    return best


def depth_separable_conv2d(x_nchw, params):
    (w_dw, b_dw, g1, be1, m1, v1, w_pw, b_pw, g2, be2, m2, v2) = params
    N, C, H, W = x_nchw.shape
    k = w_dw.shape[-1]
    Ho, Wo = H - k + 1, W - k + 1        # stride=1, padding=0 (PyTorch defaults)
    Cout = w_pw.shape[0]

    # ---- lane/sublane-dense padded geometry --------------------------------
    HoP = _round_up(Ho, 8)                           # sublane-aligned output rows
    lane_step = 128 // math.gcd(Cout, 128)
    WoP = _round_up(Wo, lane_step)                   # WoP*Cout is a 128-multiple
    Hp, Wp = HoP + k - 1, WoP + k - 1
    lanes_in, lanes_out = WoP * C, WoP * Cout
    assert lanes_out % 128 == 0
    # Block-diagonal pointwise trick bounded (its weight grows O(WoP^2)).
    assert lanes_in <= 512 and lanes_out <= 512, \
        "TODO(synk): chunk Wo for large images"

    # Fold conv biases + eval-mode BatchNorm into per-channel scale / shift.
    s_dw = g1 / jnp.sqrt(v1 + EPS)
    o_dw = (b_dw - m1) * s_dw + be1
    s_pw = g2 / jnp.sqrt(v2 + EPS)
    o_pw = (b_pw - m2) * s_pw + be2

    # ---- host-side repack into lane-dense layouts (weights are tiny) -------
    x = jnp.transpose(x_nchw, (0, 2, 3, 1))                      # NHWC
    x = jnp.pad(x, ((0, 0), (0, Hp - H), (0, Wp - W), (0, 0)))   # zero pad H/W
    x = x.reshape(N, Hp, Wp * C)                                 # (N, Hp, Wp*C)

    # depthwise taps: (C,1,k,k) -> (k*k, C) -> lane-tiled (k*k, WoP*C)
    w_taps = jnp.transpose(w_dw[:, 0, :, :], (1, 2, 0)).reshape(k * k, C)
    w_taps = jnp.tile(w_taps, (1, WoP))

    s1 = jnp.tile(s_dw, WoP).reshape(1, lanes_in)
    b1 = jnp.tile(o_dw, WoP).reshape(1, lanes_in)

    # pointwise 1x1 weight as block-diagonal (WoP*C, WoP*Cout):
    #   Wbig[w*C + c, v*Cout + o] = delta(w, v) * w_pw[o, c]
    wpw_t = jnp.transpose(w_pw[:, :, 0, 0], (1, 0))              # (C, Cout)
    eye = jnp.eye(WoP, dtype=wpw_t.dtype)
    w_big = jnp.einsum('wv,co->wcvo', eye, wpw_t).reshape(lanes_in, lanes_out)

    s2 = jnp.tile(s_pw, WoP).reshape(1, lanes_out)
    b2 = jnp.tile(o_pw, WoP).reshape(1, lanes_out)

    # ---- tiling policy ------------------------------------------------------
    # Each grid step carries ~0.35us fixed overhead, so maximise per-step work,
    # but keep >= 2 steps on a "parallel" axis so both v7x TensorCores get work.
    TH = _row_tile(HoP, lanes_out * 4)
    r_tiles = HoP // TH
    NB = 1
    while (NB * 2 <= N and N % (NB * 2) == 0
           and (N // (NB * 2)) * r_tiles >= 2
           and NB * 2 * Hp * Wp * C * 4 <= (4 << 20)):
        NB *= 2
    grid = (N // NB, r_tiles)

    def _vmem_limit(const_bufs):
        in_blk = NB * Hp * Wp * C * 4                 # per buffer (double-buffered)
        out_blk = NB * TH * lanes_out * 4
        const = (k * k * lanes_in + lanes_in * lanes_out
                 + 2 * lanes_in + 2 * lanes_out) * 4
        need = 2 * in_blk + 2 * out_blk + const_bufs * const
        # +4 MiB headroom for compiler scratch; cap at 48 MiB (< v7x's 64 MiB).
        return int(min(max(need + (4 << 20), 8 << 20), 48 << 20))

    kern = functools.partial(_fused_dsconv_kernel, k=k, nb=NB, th=TH,
                             wop=WoP, c=C, cout=Cout)

    def _run(single_buffer_consts):
        cmode = ({'pipeline_mode': pl.Buffered(1)} if single_buffer_consts else {})
        in_specs = [
            # Full padded rows per sample block; block index is constant along
            # the row-tile axis, so it is DMA'd once and stays resident in VMEM.
            # TODO(synk): halo row-tiled input blocks once this nears ~32 MiB.
            pl.BlockSpec((NB, Hp, Wp * C), lambda n, r: (n, 0, 0)),
            pl.BlockSpec((k * k, lanes_in), lambda n, r: (0, 0), **cmode),
            pl.BlockSpec((lanes_in, lanes_out), lambda n, r: (0, 0), **cmode),
            pl.BlockSpec((1, lanes_in), lambda n, r: (0, 0), **cmode),
            pl.BlockSpec((1, lanes_in), lambda n, r: (0, 0), **cmode),
            pl.BlockSpec((1, lanes_out), lambda n, r: (0, 0), **cmode),
            pl.BlockSpec((1, lanes_out), lambda n, r: (0, 0), **cmode),
        ]
        return pl.pallas_call(
            kern,
            out_shape=jax.ShapeDtypeStruct((N, HoP, lanes_out), jnp.float32),
            grid=grid,
            in_specs=in_specs,
            out_specs=pl.BlockSpec((NB, TH, lanes_out), lambda n, r: (n, r, 0)),
            compiler_params=pltpu.CompilerParams(
                dimension_semantics=("parallel", "parallel"),
                vmem_limit_bytes=_vmem_limit(1 if single_buffer_consts else 2)),
        )(x, w_taps, w_big, s1, b1, s2, b2)

    try:
        out = _run(True)
    except Exception:
        # pipeline_mode=pl.Buffered(1) not supported on this JAX/Mosaic build;
        # the constants are tiny at these shapes, so double-buffering is harmless.
        out = _run(False)

    # (N, HoP, WoP*Cout) -> slice off the pad -> NCHW
    out = out.reshape(N, HoP, WoP, Cout)[:, :Ho, :Wo, :]
    return jnp.transpose(out, (0, 3, 1, 2))


def reference(x, params):
    """Pure-JAX NCHW reference mirroring the PyTorch module (BN in eval mode)."""
    (w_dw, b_dw, g1, be1, m1, v1, w_pw, b_pw, g2, be2, m2, v2) = params
    C = x.shape[1]

    def bn(y, g, be, m, v):
        return (g[None, :, None, None] * (y - m[None, :, None, None])
                / jnp.sqrt(v + EPS)[None, :, None, None] + be[None, :, None, None])

    dw = lax.conv_general_dilated(
        x, w_dw, (1, 1), 'VALID',
        feature_group_count=C,
        dimension_numbers=('NCHW', 'OIHW', 'NCHW')) + b_dw[None, :, None, None]
    dw = jnp.maximum(bn(dw, g1, be1, m1, v1), 0.0)
    pw = jnp.einsum('nchw,oc->nohw', dw, w_pw[:, :, 0, 0]) + b_pw[None, :, None, None]
    return jnp.maximum(bn(pw, g2, be2, m2, v2), 0.0)


if __name__ == "__main__":
    key = jax.random.PRNGKey(0)
    keys = jax.random.split(key, 12)

    N, C, H, W = 2, 4, 16, 16
    Cout, k = 8, 3

    x = jax.random.normal(keys[0], (N, C, H, W), jnp.float32)
    # depthwise conv params (C, 1, k, k) + bias (C,)
    w_dw = jax.random.normal(keys[1], (C, 1, k, k), jnp.float32) * 0.2
    b_dw = jax.random.normal(keys[2], (C,), jnp.float32) * 0.1
    # BatchNorm2d(C): gamma, beta, running_mean, running_var
    g1 = jax.random.uniform(keys[3], (C,), jnp.float32, minval=0.5, maxval=1.5)
    be1 = jax.random.normal(keys[4], (C,), jnp.float32) * 0.1
    m1 = jax.random.normal(keys[5], (C,), jnp.float32) * 0.1
    v1 = jax.random.uniform(keys[6], (C,), jnp.float32, minval=0.5, maxval=1.5)
    # pointwise conv params (Cout, C, 1, 1) + bias (Cout,)
    w_pw = jax.random.normal(keys[7], (Cout, C, 1, 1), jnp.float32) * 0.2
    b_pw = jax.random.normal(keys[8], (Cout,), jnp.float32) * 0.1
    # BatchNorm2d(Cout)
    g2 = jax.random.uniform(keys[9], (Cout,), jnp.float32, minval=0.5, maxval=1.5)
    be2 = jax.random.normal(keys[10], (Cout,), jnp.float32) * 0.1
    m2 = jax.random.normal(keys[11], (Cout,), jnp.float32) * 0.1
    v2 = jnp.ones((Cout,), jnp.float32)

    params = (w_dw, b_dw, g1, be1, m1, v1, w_pw, b_pw, g2, be2, m2, v2)

    out = jax.block_until_ready(depth_separable_conv2d(x, params))
    ref = jax.block_until_ready(reference(x, params))

    assert out.shape == (N, Cout, H - k + 1, W - k + 1), out.shape
    assert jnp.allclose(out, ref, atol=2e-4, rtol=2e-4), float(jnp.max(jnp.abs(out - ref)))
    print("KERNEL_OK")
</pallas_src>

<mosaic_0001>
module attributes {stable_mosaic.version = 11 : i64} {
  func.func @_fused_dsconv_kernel(%arg0: i32, %arg1: i32, %arg2: memref<1x18x72xf32, #tpu.memory_space<vmem>>, %arg3: memref<9x64xf32, #tpu.memory_space<vmem>>, %arg4: memref<64x128xf32, #tpu.memory_space<vmem>>, %arg5: memref<1x64xf32, #tpu.memory_space<vmem>>, %arg6: memref<1x64xf32, #tpu.memory_space<vmem>>, %arg7: memref<1x128xf32, #tpu.memory_space<vmem>>, %arg8: memref<1x128xf32, #tpu.memory_space<vmem>>, %arg9: memref<1x16x128xf32, #tpu.memory_space<vmem>>) attributes {dimension_semantics = [#tpu.dimension_semantics<parallel>, #tpu.dimension_semantics<parallel>], iteration_bounds = array<i64: 2, 1>, scalar_prefetch = 0 : i64, scratch_operands = 0 : i64, tpu.core_type = #tpu.core_type<tc>, window_params = [{transform_indices = @transform_0, window_bounds = array<i64: 1, 18, 72>}, {pipeline_mode = #tpu.pipeline_mode<synchronous>, transform_indices = @transform_1, window_bounds = array<i64: 9, 64>}, {pipeline_mode = #tpu.pipeline_mode<synchronous>, transform_indices = @transform_2, window_bounds = array<i64: 64, 128>}, {pipeline_mode = #tpu.pipeline_mode<synchronous>, transform_indices = @transform_3, window_bounds = array<i64: 1, 64>}, {pipeline_mode = #tpu.pipeline_mode<synchronous>, transform_indices = @transform_4, window_bounds = array<i64: 1, 64>}, {pipeline_mode = #tpu.pipeline_mode<synchronous>, transform_indices = @transform_5, window_bounds = array<i64: 1, 128>}, {pipeline_mode = #tpu.pipeline_mode<synchronous>, transform_indices = @transform_6, window_bounds = array<i64: 1, 128>}, {transform_indices = @transform_7, window_bounds = array<i64: 1, 16, 128>}]} {
    %c16_i32 = arith.constant 16 : i32
    %0 = arith.muli %arg1, %c16_i32 : i32
    %1 = tpu.assume_multiple %0, 8 : i32
    %c0 = arith.constant 0 : index
    %c0_0 = arith.constant 0 : index
    %2 = vector.load %arg4[%c0, %c0_0] : memref<64x128xf32, #tpu.memory_space<vmem>>, vector<64x128xf32>
    %c0_1 = arith.constant 0 : index
    %c0_2 = arith.constant 0 : index
    %3 = vector.load %arg5[%c0_1, %c0_2] : memref<1x64xf32, #tpu.memory_space<vmem>>, vector<1x64xf32>
    %c0_3 = arith.constant 0 : index
    %c0_4 = arith.constant 0 : index
    %4 = vector.load %arg6[%c0_3, %c0_4] : memref<1x64xf32, #tpu.memory_space<vmem>>, vector<1x64xf32>
    %c0_5 = arith.constant 0 : index
    %c0_6 = arith.constant 0 : index
    %5 = vector.load %arg7[%c0_5, %c0_6] : memref<1x128xf32, #tpu.memory_space<vmem>>, vector<1x128xf32>
    %c0_7 = arith.constant 0 : index
    %c0_8 = arith.constant 0 : index
    %6 = vector.load %arg8[%c0_7, %c0_8] : memref<1x128xf32, #tpu.memory_space<vmem>>, vector<1x128xf32>
    %c0_9 = arith.constant 0 : index
    %c0_10 = arith.constant 0 : index
    %7 = vector.load %arg3[%c0_9, %c0_10] : memref<9x64xf32, #tpu.memory_space<vmem>>, vector<1x64xf32>
    %8 = vector.shape_cast %7 : vector<1x64xf32> to vector<64xf32>
    %9 = vector.shape_cast %8 : vector<64xf32> to vector<1x64xf32>
    %10 = vector.broadcast %9 : vector<1x64xf32> to vector<16x64xf32>
    %c1 = arith.constant 1 : index
    %c0_11 = arith.constant 0 : index
    %11 = vector.load %arg3[%c1, %c0_11] : memref<9x64xf32, #tpu.memory_space<vmem>>, vector<1x64xf32>
    %12 = vector.shape_cast %11 : vector<1x64xf32> to vector<64xf32>
    %13 = vector.shape_cast %12 : vector<64xf32> to vector<1x64xf32>
    %14 = vector.broadcast %13 : vector<1x64xf32> to vector<16x64xf32>
    %c2 = arith.constant 2 : index
    %c0_12 = arith.constant 0 : index
    %15 = vector.load %arg3[%c2, %c0_12] : memref<9x64xf32, #tpu.memory_space<vmem>>, vector<1x64xf32>
    %16 = vector.shape_cast %15 : vector<1x64xf32> to vector<64xf32>
    %17 = vector.shape_cast %16 : vector<64xf32> to vector<1x64xf32>
    %18 = vector.broadcast %17 : vector<1x64xf32> to vector<16x64xf32>
    %c3 = arith.constant 3 : index
    %c0_13 = arith.constant 0 : index
    %19 = vector.load %arg3[%c3, %c0_13] : memref<9x64xf32, #tpu.memory_space<vmem>>, vector<1x64xf32>
    %20 = vector.shape_cast %19 : vector<1x64xf32> to vector<64xf32>
    %21 = vector.shape_cast %20 : vector<64xf32> to vector<1x64xf32>
    %22 = vector.broadcast %21 : vector<1x64xf32> to vector<16x64xf32>
    %c4 = arith.constant 4 : index
    %c0_14 = arith.constant 0 : index
    %23 = vector.load %arg3[%c4, %c0_14] : memref<9x64xf32, #tpu.memory_space<vmem>>, vector<1x64xf32>
    %24 = vector.shape_cast %23 : vector<1x64xf32> to vector<64xf32>
    %25 = vector.shape_cast %24 : vector<64xf32> to vector<1x64xf32>
    %26 = vector.broadcast %25 : vector<1x64xf32> to vector<16x64xf32>
    %c5 = arith.constant 5 : index
    %c0_15 = arith.constant 0 : index
    %27 = vector.load %arg3[%c5, %c0_15] : memref<9x64xf32, #tpu.memory_space<vmem>>, vector<1x64xf32>
    %28 = vector.shape_cast %27 : vector<1x64xf32> to vector<64xf32>
    %29 = vector.shape_cast %28 : vector<64xf32> to vector<1x64xf32>
    %30 = vector.broadcast %29 : vector<1x64xf32> to vector<16x64xf32>
    %c6 = arith.constant 6 : index
    %c0_16 = arith.constant 0 : index
    %31 = vector.load %arg3[%c6, %c0_16] : memref<9x64xf32, #tpu.memory_space<vmem>>, vector<1x64xf32>
    %32 = vector.shape_cast %31 : vector<1x64xf32> to vector<64xf32>
    %33 = vector.shape_cast %32 : vector<64xf32> to vector<1x64xf32>
    %34 = vector.broadcast %33 : vector<1x64xf32> to vector<16x64xf32>
    %c7 = arith.constant 7 : index
    %c0_17 = arith.constant 0 : index
    %35 = vector.load %arg3[%c7, %c0_17] : memref<9x64xf32, #tpu.memory_space<vmem>>, vector<1x64xf32>
    %36 = vector.shape_cast %35 : vector<1x64xf32> to vector<64xf32>
    %37 = vector.shape_cast %36 : vector<64xf32> to vector<1x64xf32>
    %38 = vector.broadcast %37 : vector<1x64xf32> to vector<16x64xf32>
    %c8 = arith.constant 8 : index
    %c0_18 = arith.constant 0 : index
    %39 = vector.load %arg3[%c8, %c0_18] : memref<9x64xf32, #tpu.memory_space<vmem>>, vector<1x64xf32>
    %40 = vector.shape_cast %39 : vector<1x64xf32> to vector<64xf32>
    %41 = vector.shape_cast %40 : vector<64xf32> to vector<1x64xf32>
    %42 = vector.broadcast %41 : vector<1x64xf32> to vector<16x64xf32>
    %c0_19 = arith.constant 0 : index
    %43 = arith.index_cast %1 : i32 to index
    %c0_20 = arith.constant 0 : index
    %44 = vector.load %arg2[%c0_19, %43, %c0_20] : memref<1x18x72xf32, #tpu.memory_space<vmem>>, vector<1x18x72xf32>
    %45 = vector.shape_cast %44 : vector<1x18x72xf32> to vector<18x72xf32>
    %46 = vector.extract_strided_slice %45 {offsets = [0, 0], sizes = [18, 64], strides = [1, 1]} : vector<18x72xf32> to vector<18x64xf32>
    %47 = vector.extract_strided_slice %45 {offsets = [0, 4], sizes = [18, 64], strides = [1, 1]} : vector<18x72xf32> to vector<18x64xf32>
    %48 = vector.extract_strided_slice %45 {offsets = [0, 8], sizes = [18, 64], strides = [1, 1]} : vector<18x72xf32> to vector<18x64xf32>
    %cst = arith.constant 0.000000e+00 : f32
    %49 = vector.broadcast %cst : f32 to vector<16x64xf32>
    %50 = vector.extract_strided_slice %46 {offsets = [0, 0], sizes = [16, 64], strides = [1, 1]} : vector<18x64xf32> to vector<16x64xf32>
    %51 = arith.mulf %50, %10 : vector<16x64xf32>
    %52 = arith.addf %49, %51 : vector<16x64xf32>
    %53 = vector.extract_strided_slice %47 {offsets = [0, 0], sizes = [16, 64], strides = [1, 1]} : vector<18x64xf32> to vector<16x64xf32>
    %54 = arith.mulf %53, %14 : vector<16x64xf32>
    %55 = arith.addf %52, %54 : vector<16x64xf32>
    %56 = vector.extract_strided_slice %48 {offsets = [0, 0], sizes = [16, 64], strides = [1, 1]} : vector<18x64xf32> to vector<16x64xf32>
    %57 = arith.mulf %56, %18 : vector<16x64xf32>
    %58 = arith.addf %55, %57 : vector<16x64xf32>
    %59 = vector.extract_strided_slice %46 {offsets = [1, 0], sizes = [16, 64], strides = [1, 1]} : vector<18x64xf32> to vector<16x64xf32>
    %60 = arith.mulf %59, %22 : vector<16x64xf32>
    %61 = arith.addf %58, %60 : vector<16x64xf32>
    %62 = vector.extract_strided_slice %47 {offsets = [1, 0], sizes = [16, 64], strides = [1, 1]} : vector<18x64xf32> to vector<16x64xf32>
    %63 = arith.mulf %62, %26 : vector<16x64xf32>
    %64 = arith.addf %61, %63 : vector<16x64xf32>
    %65 = vector.extract_strided_slice %48 {offsets = [1, 0], sizes = [16, 64], strides = [1, 1]} : vector<18x64xf32> to vector<16x64xf32>
    %66 = arith.mulf %65, %30 : vector<16x64xf32>
    %67 = arith.addf %64, %66 : vector<16x64xf32>
    %68 = vector.extract_strided_slice %46 {offsets = [2, 0], sizes = [16, 64], strides = [1, 1]} : vector<18x64xf32> to vector<16x64xf32>
    %69 = arith.mulf %68, %34 : vector<16x64xf32>
    %70 = arith.addf %67, %69 : vector<16x64xf32>
    %71 = vector.extract_strided_slice %47 {offsets = [2, 0], sizes = [16, 64], strides = [1, 1]} : vector<18x64xf32> to vector<16x64xf32>
    %72 = arith.mulf %71, %38 : vector<16x64xf32>
    %73 = arith.addf %70, %72 : vector<16x64xf32>
    %74 = vector.extract_strided_slice %48 {offsets = [2, 0], sizes = [16, 64], strides = [1, 1]} : vector<18x64xf32> to vector<16x64xf32>
    %75 = arith.mulf %74, %42 : vector<16x64xf32>
    %76 = arith.addf %73, %75 : vector<16x64xf32>
    %77 = vector.broadcast %3 : vector<1x64xf32> to vector<16x64xf32>
    %78 = arith.mulf %76, %77 : vector<16x64xf32>
    %79 = vector.broadcast %4 : vector<1x64xf32> to vector<16x64xf32>
    %80 = arith.addf %78, %79 : vector<16x64xf32>
    %cst_21 = arith.constant 0.000000e+00 : f32
    %81 = vector.broadcast %cst_21 : f32 to vector<16x64xf32>
    %82 = arith.maximumf %80, %81 : vector<16x64xf32>
    %cst_22 = arith.constant dense<0.000000e+00> : vector<16x128xf32>
    %83 = tpu.matmul %82, %2, %cst_22 {dimension_numbers = #tpu.dot_dimension_numbers<[1], [0], [0], [1], [0, 0, 1, 1], [], []>} : vector<16x64xf32>, vector<64x128xf32>, vector<16x128xf32> -> vector<16x128xf32>
    %84 = vector.broadcast %5 : vector<1x128xf32> to vector<16x128xf32>
    %85 = arith.mulf %83, %84 : vector<16x128xf32>
    %86 = vector.broadcast %6 : vector<1x128xf32> to vector<16x128xf32>
    %87 = arith.addf %85, %86 : vector<16x128xf32>
    %cst_23 = arith.constant 0.000000e+00 : f32
    %88 = vector.broadcast %cst_23 : f32 to vector<16x128xf32>
    %89 = arith.maximumf %87, %88 : vector<16x128xf32>
    %90 = vector.shape_cast %89 : vector<16x128xf32> to vector<1x16x128xf32>
    %c0_24 = arith.constant 0 : index
    %c0_25 = arith.constant 0 : index
    %c0_26 = arith.constant 0 : index
    %91 = vector.load %arg9[%c0_24, %c0_25, %c0_26] : memref<1x16x128xf32, #tpu.memory_space<vmem>>, vector<1x16x128xf32>
    tpu.vector_store %arg9[%c0_24, %c0_25, %c0_26], %90 {strides = array<i32>} : memref<1x16x128xf32, #tpu.memory_space<vmem>>, vector<1x16x128xf32>,
    return
  }
  func.func @transform_0(%arg0: i32, %arg1: i32) -> (i32, i32, i32) {
    %c0_i32 = arith.constant 0 : i32
    %c0_i32_0 = arith.constant 0 : i32
    %c0_i32_1 = arith.constant 0 : i32
    return %arg0, %c0_i32, %c0_i32_0 : i32, i32, i32
  }
  func.func @transform_1(%arg0: i32, %arg1: i32) -> (i32, i32) {
    %c0_i32 = arith.constant 0 : i32
    %c0_i32_0 = arith.constant 0 : i32
    %c0_i32_1 = arith.constant 0 : i32
    return %c0_i32, %c0_i32_0 : i32, i32
  }
  func.func @transform_2(%arg0: i32, %arg1: i32) -> (i32, i32) {
    %c0_i32 = arith.constant 0 : i32
    %c0_i32_0 = arith.constant 0 : i32
    %c0_i32_1 = arith.constant 0 : i32
    return %c0_i32, %c0_i32_0 : i32, i32
  }
  func.func @transform_3(%arg0: i32, %arg1: i32) -> (i32, i32) {
    %c0_i32 = arith.constant 0 : i32
    %c0_i32_0 = arith.constant 0 : i32
    %c0_i32_1 = arith.constant 0 : i32
    return %c0_i32, %c0_i32_0 : i32, i32
  }
  func.func @transform_4(%arg0: i32, %arg1: i32) -> (i32, i32) {
    %c0_i32 = arith.constant 0 : i32
    %c0_i32_0 = arith.constant 0 : i32
    %c0_i32_1 = arith.constant 0 : i32
    return %c0_i32, %c0_i32_0 : i32, i32
  }
  func.func @transform_5(%arg0: i32, %arg1: i32) -> (i32, i32) {
    %c0_i32 = arith.constant 0 : i32
    %c0_i32_0 = arith.constant 0 : i32
    %c0_i32_1 = arith.constant 0 : i32
    return %c0_i32, %c0_i32_0 : i32, i32
  }
  func.func @transform_6(%arg0: i32, %arg1: i32) -> (i32, i32) {
    %c0_i32 = arith.constant 0 : i32
    %c0_i32_0 = arith.constant 0 : i32
    %c0_i32_1 = arith.constant 0 : i32
    return %c0_i32, %c0_i32_0 : i32, i32
  }
  func.func @transform_7(%arg0: i32, %arg1: i32) -> (i32, i32, i32) {
    %c0_i32 = arith.constant 0 : i32
    %c0_i32_0 = arith.constant 0 : i32
    return %arg0, %arg1, %c0_i32 : i32, i32, i32
  }
}

module attributes {stable_mosaic.version = 11 : i64} {
  func.func @_fused_dsconv_kernel(%arg0: i32, %arg1: i32, %arg2: memref<1x18x72xf32, #tpu.memory_space<vmem>>, %arg3: memref<9x64xf32, #tpu.memory_space<vmem>>, %arg4: memref<64x128xf32, #tpu.memory_space<vmem>>, %arg5: memref<1x64xf32, #tpu.memory_space<vmem>>, %arg6: memref<1x64xf32, #tpu.memory_space<vmem>>, %arg7: memref<1x128xf32, #tpu.memory_space<vmem>>, %arg8: memref<1x128xf32, #tpu.memory_space<vmem>>, %arg9: memref<1x16x128xf32, #tpu.memory_space<vmem>>) attributes {dimension_semantics = [#tpu.dimension_semantics<parallel>, #tpu.dimension_semantics<parallel>], iteration_bounds = array<i64: 2, 1>, scalar_prefetch = 0 : i64, scratch_operands = 0 : i64, tpu.core_type = #tpu.core_type<tc>, window_params = [{transform_indices = @transform_0, window_bounds = array<i64: 1, 18, 72>}, {pipeline_mode = #tpu.pipeline_mode<synchronous>, transform_indices = @transform_1, window_bounds = array<i64: 9, 64>}, {pipeline_mode = #tpu.pipeline_mode<synchronous>, transform_indices = @transform_2, window_bounds = array<i64: 64, 128>}, {pipeline_mode = #tpu.pipeline_mode<synchronous>, transform_indices = @transform_3, window_bounds = array<i64: 1, 64>}, {pipeline_mode = #tpu.pipeline_mode<synchronous>, transform_indices = @transform_4, window_bounds = array<i64: 1, 64>}, {pipeline_mode = #tpu.pipeline_mode<synchronous>, transform_indices = @transform_5, window_bounds = array<i64: 1, 128>}, {pipeline_mode = #tpu.pipeline_mode<synchronous>, transform_indices = @transform_6, window_bounds = array<i64: 1, 128>}, {transform_indices = @transform_7, window_bounds = array<i64: 1, 16, 128>}]} {
    %c16_i32 = arith.constant 16 : i32
    %0 = arith.muli %arg1, %c16_i32 : i32
    %1 = tpu.assume_multiple %0, 8 : i32
    %c0 = arith.constant 0 : index
    %c0_0 = arith.constant 0 : index
    %2 = vector.load %arg4[%c0, %c0_0] : memref<64x128xf32, #tpu.memory_space<vmem>>, vector<64x128xf32>
    %c0_1 = arith.constant 0 : index
    %c0_2 = arith.constant 0 : index
    %3 = vector.load %arg5[%c0_1, %c0_2] : memref<1x64xf32, #tpu.memory_space<vmem>>, vector<1x64xf32>
    %c0_3 = arith.constant 0 : index
    %c0_4 = arith.constant 0 : index
    %4 = vector.load %arg6[%c0_3, %c0_4] : memref<1x64xf32, #tpu.memory_space<vmem>>, vector<1x64xf32>
    %c0_5 = arith.constant 0 : index
    %c0_6 = arith.constant 0 : index
    %5 = vector.load %arg7[%c0_5, %c0_6] : memref<1x128xf32, #tpu.memory_space<vmem>>, vector<1x128xf32>
    %c0_7 = arith.constant 0 : index
    %c0_8 = arith.constant 0 : index
    %6 = vector.load %arg8[%c0_7, %c0_8] : memref<1x128xf32, #tpu.memory_space<vmem>>, vector<1x128xf32>
    %c0_9 = arith.constant 0 : index
    %c0_10 = arith.constant 0 : index
    %7 = vector.load %arg3[%c0_9, %c0_10] : memref<9x64xf32, #tpu.memory_space<vmem>>, vector<1x64xf32>
    %8 = vector.shape_cast %7 : vector<1x64xf32> to vector<64xf32>
    %9 = vector.shape_cast %8 : vector<64xf32> to vector<1x64xf32>
    %10 = vector.broadcast %9 : vector<1x64xf32> to vector<16x64xf32>
    %c1 = arith.constant 1 : index
    %c0_11 = arith.constant 0 : index
    %11 = vector.load %arg3[%c1, %c0_11] : memref<9x64xf32, #tpu.memory_space<vmem>>, vector<1x64xf32>
    %12 = vector.shape_cast %11 : vector<1x64xf32> to vector<64xf32>
    %13 = vector.shape_cast %12 : vector<64xf32> to vector<1x64xf32>
    %14 = vector.broadcast %13 : vector<1x64xf32> to vector<16x64xf32>
    %c2 = arith.constant 2 : index
    %c0_12 = arith.constant 0 : index
    %15 = vector.load %arg3[%c2, %c0_12] : memref<9x64xf32, #tpu.memory_space<vmem>>, vector<1x64xf32>
    %16 = vector.shape_cast %15 : vector<1x64xf32> to vector<64xf32>
    %17 = vector.shape_cast %16 : vector<64xf32> to vector<1x64xf32>
    %18 = vector.broadcast %17 : vector<1x64xf32> to vector<16x64xf32>
    %c3 = arith.constant 3 : index
    %c0_13 = arith.constant 0 : index
    %19 = vector.load %arg3[%c3, %c0_13] : memref<9x64xf32, #tpu.memory_space<vmem>>, vector<1x64xf32>
    %20 = vector.shape_cast %19 : vector<1x64xf32> to vector<64xf32>
    %21 = vector.shape_cast %20 : vector<64xf32> to vector<1x64xf32>
    %22 = vector.broadcast %21 : vector<1x64xf32> to vector<16x64xf32>
    %c4 = arith.constant 4 : index
    %c0_14 = arith.constant 0 : index
    %23 = vector.load %arg3[%c4, %c0_14] : memref<9x64xf32, #tpu.memory_space<vmem>>, vector<1x64xf32>
    %24 = vector.shape_cast %23 : vector<1x64xf32> to vector<64xf32>
    %25 = vector.shape_cast %24 : vector<64xf32> to vector<1x64xf32>
    %26 = vector.broadcast %25 : vector<1x64xf32> to vector<16x64xf32>
    %c5 = arith.constant 5 : index
    %c0_15 = arith.constant 0 : index
    %27 = vector.load %arg3[%c5, %c0_15] : memref<9x64xf32, #tpu.memory_space<vmem>>, vector<1x64xf32>
    %28 = vector.shape_cast %27 : vector<1x64xf32> to vector<64xf32>
    %29 = vector.shape_cast %28 : vector<64xf32> to vector<1x64xf32>
    %30 = vector.broadcast %29 : vector<1x64xf32> to vector<16x64xf32>
    %c6 = arith.constant 6 : index
    %c0_16 = arith.constant 0 : index
    %31 = vector.load %arg3[%c6, %c0_16] : memref<9x64xf32, #tpu.memory_space<vmem>>, vector<1x64xf32>
    %32 = vector.shape_cast %31 : vector<1x64xf32> to vector<64xf32>
    %33 = vector.shape_cast %32 : vector<64xf32> to vector<1x64xf32>
    %34 = vector.broadcast %33 : vector<1x64xf32> to vector<16x64xf32>
    %c7 = arith.constant 7 : index
    %c0_17 = arith.constant 0 : index
    %35 = vector.load %arg3[%c7, %c0_17] : memref<9x64xf32, #tpu.memory_space<vmem>>, vector<1x64xf32>
    %36 = vector.shape_cast %35 : vector<1x64xf32> to vector<64xf32>
    %37 = vector.shape_cast %36 : vector<64xf32> to vector<1x64xf32>
    %38 = vector.broadcast %37 : vector<1x64xf32> to vector<16x64xf32>
    %c8 = arith.constant 8 : index
    %c0_18 = arith.constant 0 : index
    %39 = vector.load %arg3[%c8, %c0_18] : memref<9x64xf32, #tpu.memory_space<vmem>>, vector<1x64xf32>
    %40 = vector.shape_cast %39 : vector<1x64xf32> to vector<64xf32>
    %41 = vector.shape_cast %40 : vector<64xf32> to vector<1x64xf32>
    %42 = vector.broadcast %41 : vector<1x64xf32> to vector<16x64xf32>
    %c0_19 = arith.constant 0 : index
    %43 = arith.index_cast %1 : i32 to index
    %c0_20 = arith.constant 0 : index
    %44 = vector.load %arg2[%c0_19, %43, %c0_20] : memref<1x18x72xf32, #tpu.memory_space<vmem>>, vector<1x18x72xf32>
    %45 = vector.shape_cast %44 : vector<1x18x72xf32> to vector<18x72xf32>
    %46 = vector.extract_strided_slice %45 {offsets = [0, 0], sizes = [18, 64], strides = [1, 1]} : vector<18x72xf32> to vector<18x64xf32>
    %47 = vector.extract_strided_slice %45 {offsets = [0, 4], sizes = [18, 64], strides = [1, 1]} : vector<18x72xf32> to vector<18x64xf32>
    %48 = vector.extract_strided_slice %45 {offsets = [0, 8], sizes = [18, 64], strides = [1, 1]} : vector<18x72xf32> to vector<18x64xf32>
    %cst = arith.constant 0.000000e+00 : f32
    %49 = vector.broadcast %cst : f32 to vector<16x64xf32>
    %50 = vector.extract_strided_slice %46 {offsets = [0, 0], sizes = [16, 64], strides = [1, 1]} : vector<18x64xf32> to vector<16x64xf32>
    %51 = arith.mulf %50, %10 : vector<16x64xf32>
    %52 = arith.addf %49, %51 : vector<16x64xf32>
    %53 = vector.extract_strided_slice %47 {offsets = [0, 0], sizes = [16, 64], strides = [1, 1]} : vector<18x64xf32> to vector<16x64xf32>
    %54 = arith.mulf %53, %14 : vector<16x64xf32>
    %55 = arith.addf %52, %54 : vector<16x64xf32>
    %56 = vector.extract_strided_slice %48 {offsets = [0, 0], sizes = [16, 64], strides = [1, 1]} : vector<18x64xf32> to vector<16x64xf32>
    %57 = arith.mulf %56, %18 : vector<16x64xf32>
    %58 = arith.addf %55, %57 : vector<16x64xf32>
    %59 = vector.extract_strided_slice %46 {offsets = [1, 0], sizes = [16, 64], strides = [1, 1]} : vector<18x64xf32> to vector<16x64xf32>
    %60 = arith.mulf %59, %22 : vector<16x64xf32>
    %61 = arith.addf %58, %60 : vector<16x64xf32>
    %62 = vector.extract_strided_slice %47 {offsets = [1, 0], sizes = [16, 64], strides = [1, 1]} : vector<18x64xf32> to vector<16x64xf32>
    %63 = arith.mulf %62, %26 : vector<16x64xf32>
    %64 = arith.addf %61, %63 : vector<16x64xf32>
    %65 = vector.extract_strided_slice %48 {offsets = [1, 0], sizes = [16, 64], strides = [1, 1]} : vector<18x64xf32> to vector<16x64xf32>
    %66 = arith.mulf %65, %30 : vector<16x64xf32>
    %67 = arith.addf %64, %66 : vector<16x64xf32>
    %68 = vector.extract_strided_slice %46 {offsets = [2, 0], sizes = [16, 64], strides = [1, 1]} : vector<18x64xf32> to vector<16x64xf32>
    %69 = arith.mulf %68, %34 : vector<16x64xf32>
    %70 = arith.addf %67, %69 : vector<16x64xf32>
    %71 = vector.extract_strided_slice %47 {offsets = [2, 0], sizes = [16, 64], strides = [1, 1]} : vector<18x64xf32> to vector<16x64xf32>
    %72 = arith.mulf %71, %38 : vector<16x64xf32>
    %73 = arith.addf %70, %72 : vector<16x64xf32>
    %74 = vector.extract_strided_slice %48 {offsets = [2, 0], sizes = [16, 64], strides = [1, 1]} : vector<18x64xf32> to vector<16x64xf32>
    %75 = arith.mulf %74, %42 : vector<16x64xf32>
    %76 = arith.addf %73, %75 : vector<16x64xf32>
    %77 = vector.broadcast %3 : vector<1x64xf32> to vector<16x64xf32>
    %78 = arith.mulf %76, %77 : vector<16x64xf32>
    %79 = vector.broadcast %4 : vector<1x64xf32> to vector<16x64xf32>
    %80 = arith.addf %78, %79 : vector<16x64xf32>
    %cst_21 = arith.constant 0.000000e+00 : f32
    %81 = vector.broadcast %cst_21 : f32 to vector<16x64xf32>
    %82 = arith.maximumf %80, %81 : vector<16x64xf32>
    %cst_22 = arith.constant dense<0.000000e+00> : vector<16x128xf32>
    %83 = tpu.matmul %82, %2, %cst_22 {dimension_numbers = #tpu.dot_dimension_numbers<[1], [0], [0], [1], [0, 0, 1, 1], [], []>} : vector<16x64xf32>, vector<64x128xf32>, vector<16x128xf32> -> vector<16x128xf32>
    %84 = vector.broadcast %5 : vector<1x128xf32> to vector<16x128xf32>
    %85 = arith.mulf %83, %84 : vector<16x128xf32>
    %86 = vector.broadcast %6 : vector<1x128xf32> to vector<16x128xf32>
    %87 = arith.addf %85, %86 : vector<16x128xf32>
    %cst_23 = arith.constant 0.000000e+00 : f32
    %88 = vector.broadcast %cst_23 : f32 to vector<16x128xf32>
    %89 = arith.maximumf %87, %88 : vector<16x128xf32>
    %90 = vector.shape_cast %89 : vector<16x128xf32> to vector<1x16x128xf32>
    %c0_24 = arith.constant 0 : index
    %c0_25 = arith.constant 0 : index
    %c0_26 = arith.constant 0 : index
    %91 = vector.load %arg9[%c0_24, %c0_25, %c0_26] : memref<1x16x128xf32, #tpu.memory_space<vmem>>, vector<1x16x128xf32>
    tpu.vector_store %arg9[%c0_24, %c0_25, %c0_26], %90 {strides = array<i32>} : memref<1x16x128xf32, #tpu.memory_space<vmem>>, vector<1x16x128xf32>,
    return
  }
  func.func @transform_0(%arg0: i32, %arg1: i32) -> (i32, i32, i32) {
    %c0_i32 = arith.constant 0 : i32
    %c0_i32_0 = arith.constant 0 : i32
    %c0_i32_1 = arith.constant 0 : i32
    return %arg0, %c0_i32, %c0_i32_0 : i32, i32, i32
  }
  func.func @transform_1(%arg0: i32, %arg1: i32) -> (i32, i32) {
    %c0_i32 = arith.constant 0 : i32
    %c0_i32_0 = arith.constant 0 : i32
    %c0_i32_1 = arith.constant 0 : i32
    return %c0_i32, %c0_i32_0 : i32, i32
  }
  func.func @transform_2(%arg0: i32, %arg1: i32) -> (i32, i32) {
    %c0_i32 = arith.constant 0 : i32
    %c0_i32_0 = arith.constant 0 : i32
    %c0_i32_1 = arith.constant 0 : i32
    return %c0_i32, %c0_i32_0 : i32, i32
  }
  func.func @transform_3(%arg0: i32, %arg1: i32) -> (i32, i32) {
    %c0_i32 = arith.constant 0 : i32
    %c0_i32_0 = arith.constant 0 : i32
    %c0_i32_1 = arith.constant 0 : i32
    return %c0_i32, %c0_i32_0 : i32, i32
  }
  func.func @transform_4(%arg0: i32, %arg1: i32) -> (i32, i32) {
    %c0_i32 = arith.constant 0 : i32
    %c0_i32_0 = arith.constant 0 : i32
    %c0_i32_1 = arith.constant 0 : i32
    return %c0_i32, %c0_i32_0 : i32, i32
  }
  func.func @transform_5(%arg0: i32, %arg1: i32) -> (i32, i32) {
    %c0_i32 = arith.constant 0 : i32
    %c0_i32_0 = arith.constant 0 : i32
    %c0_i32_1 = arith.constant 0 : i32
    return %c0_i32, %c0_i32_0 : i32, i32
  }
  func.func @transform_6(%arg0: i32, %arg1: i32) -> (i32, i32) {
    %c0_i32 = arith.constant 0 : i32
    %c0_i32_0 = arith.constant 0 : i32
    %c0_i32_1 = arith.constant 0 : i32
    return %c0_i32, %c0_i32_0 : i32, i32
  }
  func.func @transform_7(%arg0: i32, %arg1: i32) -> (i32, i32, i32) {
    %c0_i32 = arith.constant 0 : i32
    %c0_i32_0 = arith.constant 0 : i32
    return %arg0, %arg1, %c0_i32 : i32, i32, i32
  }
}

</mosaic_0001>

<llo_original>
// kernel: tpu_custom_call.1
$region0: #{tpu_custom_call.1}
  #allocation0 [shape = 'u32[]', space=smem, size = 0x4, offset = 0x4, fixed_abs, tag = 'smem constant byte address 0x4 - core index']
  #allocation1 [shape = 'u32[144,128]{1,0:T(1,128)}', space=vmem, size = 0x12000, scoped, tag = 'internal scratch']
  %s0 = inlined_call_operand.vmem [shape: f32[2,18,72], index: 0, kind: input, shape index: {}]
  %s1 = inlined_call_operand.vmem [shape: f32[9,64], index: 1, kind: input, shape index: {}]
  %s2 = inlined_call_operand.vmem [shape: f32[64,128], index: 2, kind: input, shape index: {}]
  %s3 = inlined_call_operand.vmem [shape: f32[1,64], index: 3, kind: input, shape index: {}]
  %s4 = inlined_call_operand.vmem [shape: f32[1,64], index: 4, kind: input, shape index: {}]
  %s5 = inlined_call_operand.vmem [shape: f32[1,128], index: 5, kind: input, shape index: {}]
  %s6 = inlined_call_operand.vmem [shape: f32[1,128], index: 6, kind: input, shape index: {}]
  %s7 = inlined_call_operand.hbm [shape: f32[2,16,128], index: 7, kind: output, shape index: {}]
  %s8 = sld [smem:[#allocation0]]
  $region61: #{tpu_custom_call.1} parent=0
    _
  %s10 = ssub.s32 1, %s8
  %s11 = scalar_select 0, %s10, %s8
  $region1: #{tpu_custom_call.1} parent=0
    #allocation2 [shape = 'u8[16384]{0}', space=vmem, size = 0x4000, scoped, tag = 'output window, operand 0']
    #allocation3 [shape = 's32[2]{0}', space=sflag, size = 0x8, scoped, tag = 'scoped memory for tpu_custom_call.1']
    %12 = vsyncpa [#allocation3], 0
    %s13 = scalar_lea.sflag [#allocation3], 1
    %14 = vsyncpa %s13, 0
    loop: start=0, step=1, limit=4
    $region2: #{tpu_custom_call.1} parent=1 // loop_pre_header
      _
    $region3: #{tpu_custom_call.1} parent=1 // loop_header
      %s16 = sphi 0, %s20
      %p17 = scmp.ge.s32.totalorder %s16, 4
      %s23 = sphi 0, %s35
      %s24 = sphi 0, %s31
      %s25 = sphi 0, %s23
      %s26 = sphi 0, %s24
      %s27 = sphi 0, %s25
      %s28 = sphi 0, %s26
      %s38 = sphi 0, %s40
      %s41 = sphi 0, %s38
      %s42 = sphi 0, %s41
      %s58 = sphi 0, %s42
      %s62 = sphi 0, %s62
      %s64 = sphi 0, %s62
      %s65 = sphi 0, %s64
      %s79 = sphi 0, %s65
      %s83 = sphi 0, %s83
      %s85 = sphi 0, %s83
      %s86 = sphi 0, %s85
      %s100 = sphi 0, %s86
      %s104 = sphi 0, %s104
      %s106 = sphi 0, %s104
      %s107 = sphi 0, %s106
      %s121 = sphi 0, %s107
      %s125 = sphi 0, %s125
      %s127 = sphi 0, %s125
      %s128 = sphi 0, %s127
      %s142 = sphi 0, %s128
      %s146 = sphi 0, %s146
      %s148 = sphi 0, %s146
      %s149 = sphi 0, %s148
      %s163 = sphi 0, %s149
      %s167 = sphi 0, %s167
      %s169 = sphi 0, %s167
      %s170 = sphi 0, %s169
      %s184 = sphi 0, %s170
      %s192 = sphi 0, %s194
      %s195 = sphi 0, %s192
      %s196 = sphi 0, %s195
      %s212 = sphi 0, %s196
    $region4: #{tpu_custom_call.1} parent=1 // loop_header_branch
      %19 = sbr.rel (%p17) target = $region8
    $region5: #{tpu_custom_call.1} parent=1 // loop_body
      %s21 = ssub.s32 %s16, 1
      %s22 = ssub.s32 %s16, 2
      %s29 = sadd.s32 1, %s24
      %p30 = scmp.ge.s32.totalorder %s29, 1
      %s31 = scalar_select %p30, 0, %s29
      %s32 = sadd.s32 1, %s23
      %s33 = scalar_select %p30, %s32, %s23
      %p34 = scmp.ge.s32.totalorder %s33, 2
      %s35 = scalar_select %p34, 0, %s33
      %s36 = ssub.s32 %s23, %s35
      %p37 = scmp.eq.s32.totalorder %s36, 0
      %s39 = sadd.s32 %s38, 1
      %s40 = scalar_select %p37, %s38, %s39
      %p43 = pneg %p37
      %p44 = scmp.eq.s32.totalorder %s16, 1
      %p45 = por %p43, %p44
      %p46 = scmp.ne.s32.totalorder %s38, %s41
      %p47 = scmp.eq.s32.totalorder %s16, 0
      %p48 = por %p46, %p47
      %p49 = scmp.ne.s32.totalorder %s38, %s41
      %p50 = scmp.eq.s32.totalorder %s21, 1
      %p51 = por %p49, %p50
      %p52 = scmp.ne.s32.totalorder %s41, %s42
      %p53 = scmp.eq.s32.totalorder %s21, 0
      %p54 = por %p52, %p53
      %p55 = scmp.ne.s32.totalorder %s41, %s42
      %p56 = scmp.eq.s32.totalorder %s22, 1
      %p57 = por %p55, %p56
      %p59 = scmp.ne.s32.totalorder %s42, %s58
      %p60 = scmp.eq.s32.totalorder %s22, 0
      %p61 = por %p59, %p60
      %s63 = sadd.s32 %s62, 1
      %p66 = scmp.eq.s32.totalorder %s16, 1
      %p67 = scmp.ne.s32.totalorder %s62, %s64
      %p68 = scmp.eq.s32.totalorder %s16, 0
      %p69 = por %p67, %p68
      %p70 = scmp.ne.s32.totalorder %s62, %s64
      %p71 = scmp.eq.s32.totalorder %s21, 1
      %p72 = por %p70, %p71
      %p73 = scmp.ne.s32.totalorder %s64, %s65
      %p74 = scmp.eq.s32.totalorder %s21, 0
      %p75 = por %p73, %p74
      %p76 = scmp.ne.s32.totalorder %s64, %s65
      %p77 = scmp.eq.s32.totalorder %s22, 1
      %p78 = por %p76, %p77
      %p80 = scmp.ne.s32.totalorder %s65, %s79
      %p81 = scmp.eq.s32.totalorder %s22, 0
      %p82 = por %p80, %p81
      %s84 = sadd.s32 %s83, 1
      %p87 = scmp.eq.s32.totalorder %s16, 1
      %p88 = scmp.ne.s32.totalorder %s83, %s85
      %p89 = scmp.eq.s32.totalorder %s16, 0
      %p90 = por %p88, %p89
      %p91 = scmp.ne.s32.totalorder %s83, %s85
      %p92 = scmp.eq.s32.totalorder %s21, 1
      %p93 = por %p91, %p92
      %p94 = scmp.ne.s32.totalorder %s85, %s86
      %p95 = scmp.eq.s32.totalorder %s21, 0
      %p96 = por %p94, %p95
      %p97 = scmp.ne.s32.totalorder %s85, %s86
      %p98 = scmp.eq.s32.totalorder %s22, 1
      %p99 = por %p97, %p98
      %p101 = scmp.ne.s32.totalorder %s86, %s100
      %p102 = scmp.eq.s32.totalorder %s22, 0
      %p103 = por %p101, %p102
      %s105 = sadd.s32 %s104, 1
      %p108 = scmp.eq.s32.totalorder %s16, 1
      %p109 = scmp.ne.s32.totalorder %s104, %s106
      %p110 = scmp.eq.s32.totalorder %s16, 0
      %p111 = por %p109, %p110
      %p112 = scmp.ne.s32.totalorder %s104, %s106
      %p113 = scmp.eq.s32.totalorder %s21, 1
      %p114 = por %p112, %p113
      %p115 = scmp.ne.s32.totalorder %s106, %s107
      %p116 = scmp.eq.s32.totalorder %s21, 0
      %p117 = por %p115, %p116
      %p118 = scmp.ne.s32.totalorder %s106, %s107
      %p119 = scmp.eq.s32.totalorder %s22, 1
      %p120 = por %p118, %p119
      %p122 = scmp.ne.s32.totalorder %s107, %s121
      %p123 = scmp.eq.s32.totalorder %s22, 0
      %p124 = por %p122, %p123
      %s126 = sadd.s32 %s125, 1
      %p129 = scmp.eq.s32.totalorder %s16, 1
      %p130 = scmp.ne.s32.totalorder %s125, %s127
      %p131 = scmp.eq.s32.totalorder %s16, 0
      %p132 = por %p130, %p131
      %p133 = scmp.ne.s32.totalorder %s125, %s127
      %p134 = scmp.eq.s32.totalorder %s21, 1
      %p135 = por %p133, %p134
      %p136 = scmp.ne.s32.totalorder %s127, %s128
      %p137 = scmp.eq.s32.totalorder %s21, 0
      %p138 = por %p136, %p137
      %p139 = scmp.ne.s32.totalorder %s127, %s128
      %p140 = scmp.eq.s32.totalorder %s22, 1
      %p141 = por %p139, %p140
      %p143 = scmp.ne.s32.totalorder %s128, %s142
      %p144 = scmp.eq.s32.totalorder %s22, 0
      %p145 = por %p143, %p144
      %s147 = sadd.s32 %s146, 1
      %p150 = scmp.eq.s32.totalorder %s16, 1
      %p151 = scmp.ne.s32.totalorder %s146, %s148
      %p152 = scmp.eq.s32.totalorder %s16, 0
      %p153 = por %p151, %p152
      %p154 = scmp.ne.s32.totalorder %s146, %s148
      %p155 = scmp.eq.s32.totalorder %s21, 1
      %p156 = por %p154, %p155
      %p157 = scmp.ne.s32.totalorder %s148, %s149
      %p158 = scmp.eq.s32.totalorder %s21, 0
      %p159 = por %p157, %p158
      %p160 = scmp.ne.s32.totalorder %s148, %s149
      %p161 = scmp.eq.s32.totalorder %s22, 1
      %p162 = por %p160, %p161
      %p164 = scmp.ne.s32.totalorder %s149, %s163
      %p165 = scmp.eq.s32.totalorder %s22, 0
      %p166 = por %p164, %p165
      %s168 = sadd.s32 %s167, 1
      %p171 = scmp.eq.s32.totalorder %s16, 1
      %p172 = scmp.ne.s32.totalorder %s167, %s169
      %p173 = scmp.eq.s32.totalorder %s16, 0
      %p174 = por %p172, %p173
      %p175 = scmp.ne.s32.totalorder %s167, %s169
      %p176 = scmp.eq.s32.totalorder %s21, 1
      %p177 = por %p175, %p176
      %p178 = scmp.ne.s32.totalorder %s169, %s170
      %p179 = scmp.eq.s32.totalorder %s21, 0
      %p180 = por %p178, %p179
      %p181 = scmp.ne.s32.totalorder %s169, %s170
      %p182 = scmp.eq.s32.totalorder %s22, 1
      %p183 = por %p181, %p182
      %p185 = scmp.ne.s32.totalorder %s170, %s184
      %p186 = scmp.eq.s32.totalorder %s22, 0
      %p187 = por %p185, %p186
      %s188 = ssub.s32 %s23, %s35
      %s189 = ssub.s32 %s24, %s31
      %s190 = sor.u32 %s188, %s189
      %p191 = scmp.eq.s32.totalorder %s190, 0
      %s193 = sadd.s32 %s192, 1
      %s194 = scalar_select %p191, %s192, %s193
      %p197 = pneg %p191
      %p198 = scmp.eq.s32.totalorder %s16, 1
      %p199 = por %p197, %p198
      %p200 = scmp.ne.s32.totalorder %s192, %s195
      %p201 = scmp.eq.s32.totalorder %s16, 0
      %p202 = por %p200, %p201
      %p203 = scmp.ne.s32.totalorder %s192, %s195
      %p204 = scmp.eq.s32.totalorder %s21, 1
      %p205 = por %p203, %p204
      %p206 = scmp.ne.s32.totalorder %s195, %s196
      %p207 = scmp.eq.s32.totalorder %s21, 0
      %p208 = por %p206, %p207
      %p209 = scmp.ne.s32.totalorder %s195, %s196
      %p210 = scmp.eq.s32.totalorder %s22, 1
      %p211 = por %p209, %p210
      %p213 = scmp.ne.s32.totalorder %s196, %s212
      %p214 = scmp.eq.s32.totalorder %s22, 0
      %p215 = por %p213, %p214
      %p216 = scmp.le.s32.totalorder 1, %s16
      %p217 = scmp.lt.s32.totalorder %s16, 3
      %p218 = pnand %p216, %p217
      %p219 = pneg %p218
      // Predicated region
      $region9: #{tpu_custom_call.1} parent=5 // pred_check
        _
      $region10: #{tpu_custom_call.1} parent=5 // pred_check_branch
        %221 = sbr.rel (%p218) target = $region12
      $region11: #{tpu_custom_call.1} parent=5 // pred_region
        %s222 = ssub.s32 %s16, 1
        // Predicated region
        $region13: #{tpu_custom_call.1} parent=11 // pred_check
          %p223 = pneg %p75
        $region14: #{tpu_custom_call.1} parent=11 // pred_check_branch
          %225 = sbr.rel (%p223) target = $region16
        $region15: #{tpu_custom_call.1} parent=11 // pred_region
          _
        $region16: #{tpu_custom_call.1} parent=11 // pred_fallthru
          _
        // Predicated region
        $region17: #{tpu_custom_call.1} parent=11 // pred_check
          %p226 = pneg %p96
        $region18: #{tpu_custom_call.1} parent=11 // pred_check_branch
          %228 = sbr.rel (%p226) target = $region20
        $region19: #{tpu_custom_call.1} parent=11 // pred_region
          _
        $region20: #{tpu_custom_call.1} parent=11 // pred_fallthru
          _
        // Predicated region
        $region21: #{tpu_custom_call.1} parent=11 // pred_check
          %p229 = pneg %p117
        $region22: #{tpu_custom_call.1} parent=11 // pred_check_branch
          %231 = sbr.rel (%p229) target = $region24
        $region23: #{tpu_custom_call.1} parent=11 // pred_region
          _
        $region24: #{tpu_custom_call.1} parent=11 // pred_fallthru
          _
        // Predicated region
        $region25: #{tpu_custom_call.1} parent=11 // pred_check
          %p232 = pneg %p138
        $region26: #{tpu_custom_call.1} parent=11 // pred_check_branch
          %234 = sbr.rel (%p232) target = $region28
        $region27: #{tpu_custom_call.1} parent=11 // pred_region
          _
        $region28: #{tpu_custom_call.1} parent=11 // pred_fallthru
          _
        // Predicated region
        $region29: #{tpu_custom_call.1} parent=11 // pred_check
          %p235 = pneg %p159
        $region30: #{tpu_custom_call.1} parent=11 // pred_check_branch
          %237 = sbr.rel (%p235) target = $region32
        $region31: #{tpu_custom_call.1} parent=11 // pred_region
          _
        $region32: #{tpu_custom_call.1} parent=11 // pred_fallthru
          _
        // Predicated region
        $region33: #{tpu_custom_call.1} parent=11 // pred_check
          %p238 = pneg %p180
        $region34: #{tpu_custom_call.1} parent=11 // pred_check_branch
          %240 = sbr.rel (%p238) target = $region36
        $region35: #{tpu_custom_call.1} parent=11 // pred_region
          _
        $region36: #{tpu_custom_call.1} parent=11 // pred_fallthru
          _
      $region12: #{tpu_custom_call.1} parent=5 // pred_fallthru
        _
      %p241 = scmp.lt.s32.totalorder %s16, 2
      // Predicated region
      $region37: #{tpu_custom_call.1} parent=5 // pred_check
        %p242 = pneg %p241
      $region38: #{tpu_custom_call.1} parent=5 // pred_check_branch
        %244 = sbr.rel (%p242) target = $region40
      $region39: #{tpu_custom_call.1} parent=5 // pred_region
        // Predicated region
        $region41: #{tpu_custom_call.1} parent=39 // pred_check
          %p245 = pneg %p48
        $region42: #{tpu_custom_call.1} parent=39 // pred_check_branch
          %247 = sbr.rel (%p245) target = $region44
        $region43: #{tpu_custom_call.1} parent=39 // pred_region
          %p248 = scmp.lt.s32.totalorder %s23, 1
          %s249 = scalar_select %p248, %s23, 1
          %s250 = smul.addr %s249, 3
          %s251 = smul.addr %s250, 8
          %s252 = scalar_lea.vmem %s0, %s251
        $region44: #{tpu_custom_call.1} parent=39 // pred_fallthru
          _
      $region40: #{tpu_custom_call.1} parent=5 // pred_fallthru
        _
      %p253 = scmp.le.s32.totalorder 1, %s16
      %p254 = scmp.lt.s32.totalorder %s16, 3
      %p255 = pnand %p253, %p254
      %p256 = pneg %p255
      // Predicated region
      $region45: #{tpu_custom_call.1} parent=5 // pred_check
        _
      $region46: #{tpu_custom_call.1} parent=5 // pred_check_branch
        %258 = sbr.rel (%p255) target = $region48
      $region47: #{tpu_custom_call.1} parent=5 // pred_region
        %s259 = ssub.s32 %s16, 1
        %p260 = scmp.lt.s32.totalorder %s25, 1
        %s261 = scalar_select %p260, %s25, 1
        %s262 = smul.addr %s261, 3
        %s263 = smul.addr %s262, 8
        %s264 = scalar_lea.vmem %s0, %s263
        %p265 = pneg %p54
        %p266 = pneg %p51
        %p267 = pneg %p75
        %p268 = pneg %p72
        %p269 = pneg %p96
        %p270 = pneg %p93
        %p271 = pneg %p117
        %p272 = pneg %p114
        %p273 = pneg %p138
        %p274 = pneg %p135
        %p275 = pneg %p159
        %p276 = pneg %p156
        %p277 = pneg %p180
        %p278 = pneg %p177
        %p279 = pneg %p208
        %p280 = pneg %p205
        %s281 = sand.u32 %s195, 1
        %s282 = scalar_lea.sflag [#allocation3], %s281
        %s283 = sand.u32 %s195, 1
        %s284 = smul.addr %s283, 16
        %s285 = scalar_lea.vmem [#allocation2], %s284
        %p286 = scmp.lt.s32.totalorder %s25, 1
        %s287 = scalar_select %p286, %s25, 1
        %s288 = smul.addr %s287, 3
        %s289 = smul.addr %s288, 8
        %s290 = scalar_lea.vmem %s0, %s289
        %s291 = smul.u32 2, %s26
        %s292 = smul.u32 %s26, 16
        %v293 = vld [vmem:[%s2] sm:$0xff]
        %v294 = vld [vmem:[%s2 + $0x8] sm:$0xff]
        %v295 = vld [vmem:[%s2 + $0x10] sm:$0xff]
        %v296 = vld [vmem:[%s2 + $0x18] sm:$0xff]
        %v297 = vld [vmem:[%s2 + $0x20] sm:$0xff]
        %v298 = vld [vmem:[%s2 + $0x28] sm:$0xff]
        %v299 = vld [vmem:[%s2 + $0x30] sm:$0xff]
        %v300 = vld [vmem:[%s2 + $0x38] sm:$0xff]
        %v301 = vld [vmem:[%s3] sm:$0x1]
        %v302 = vld [vmem:[%s4] sm:$0x1]
        %v303 = vld [vmem:[%s5] sm:$0x1]
        %v304 = vld [vmem:[%s6] sm:$0x1]
        %v305 = vld [vmem:[%s1] sm:$0x1]
        %v306 = vlaneseq
        %v307 = vshrl.u32 %v306, 7
        %v308 = vsub.s32 0, %v307
        %v309 = vrot.slane %v305, %v308
        %v310 = vld [vmem:[%s1 + $0x1] sm:$0x1]
        %v311 = vlaneseq
        %v312 = vshrl.u32 %v311, 7
        %v313 = vsub.s32 0, %v312
        %v314 = vrot.slane %v310, %v313
        %v315 = vld [vmem:[%s1 + $0x2] sm:$0x1]
        %v316 = vlaneseq
        %v317 = vshrl.u32 %v316, 7
        %v318 = vsub.s32 0, %v317
        %v319 = vrot.slane %v315, %v318
        %v320 = vld [vmem:[%s1 + $0x3] sm:$0x1]
        %v321 = vlaneseq
        %v322 = vshrl.u32 %v321, 7
        %v323 = vsub.s32 0, %v322
        %v324 = vrot.slane %v320, %v323
        %v325 = vld [vmem:[%s1 + $0x4] sm:$0x1]
        %v326 = vlaneseq
        %v327 = vshrl.u32 %v326, 7
        %v328 = vsub.s32 0, %v327
        %v329 = vrot.slane %v325, %v328
        %v330 = vld [vmem:[%s1 + $0x5] sm:$0x1]
        %v331 = vlaneseq
        %v332 = vshrl.u32 %v331, 7
        %v333 = vsub.s32 0, %v332
        %v334 = vrot.slane %v330, %v333
        %v335 = vld [vmem:[%s1 + $0x6] sm:$0x1]
        %v336 = vlaneseq
        %v337 = vshrl.u32 %v336, 7
        %v338 = vsub.s32 0, %v337
        %v339 = vrot.slane %v335, %v338
        %v340 = vld [vmem:[%s1 + $0x7] sm:$0x1]
        %v341 = vlaneseq
        %v342 = vshrl.u32 %v341, 7
        %v343 = vsub.s32 0, %v342
        %v344 = vrot.slane %v340, %v343
        %v345 = vld [vmem:[%s1 + $0x8] sm:$0x1]
        %v346 = vlaneseq
        %v347 = vshrl.u32 %v346, 7
        %v348 = vsub.s32 0, %v347
        %v349 = vrot.slane %v345, %v348
        %s350 = scalar_lea.vmem %s290, %s292
        %v351 = vld [vmem:[%s350] sm:$0xff]
        %v352 = vld [vmem:[%s350 + $0x8] sm:$0xff]
        %v353 = vld [vmem:[%s350 + $0x10] sm:$0x3]
        %v354 = vmul.f32 %v351, %v309
        %v355 = vmul.f32 %v352, %v309
        %v356 = vadd.f32 %v354, 0.0
        %v357 = vadd.f32 %v355, 0.0
        %359 = vrot.lane.b32.xlu0 %v314, 4
        %v360 = vpop.permute.xlu0 %359
        %v362 = vmul.f32 %v351, %v360
        %v363 = vmul.f32 %v352, %v360
        %366 = vrot.lane.b32.xlu0 %v362, 124
        %v367 = vpop.permute.xlu0 %366
        %368 = vrot.lane.b32.xlu0 %v363, 124
        %v369 = vpop.permute.xlu0 %368
        %v372 = vadd.f32 %v356, %v367
        %v373 = vadd.f32 %v357, %v369
        %375 = vrot.lane.b32.xlu0 %v319, 8
        %v376 = vpop.permute.xlu0 %375
        %v378 = vmul.f32 %v351, %v376
        %v379 = vmul.f32 %v352, %v376
        %382 = vrot.lane.b32.xlu0 %v378, 120
        %v383 = vpop.permute.xlu0 %382
        %384 = vrot.lane.b32.xlu0 %v379, 120
        %v385 = vpop.permute.xlu0 %384
        %v388 = vadd.f32 %v372, %v383
        %v389 = vadd.f32 %v373, %v385
        %v390 = vmul.f32 %v351, %v324
        %v391 = vmul.f32 %v352, %v324
        %v392 = vmul.f32 %v353, %v324
        %vm396 = vcmask 1046528
        %v397 = vrot.slane %v390, 1
        %v398 = vrot.slane %v391, 1
        %v399 = vsel %vm396, %v397, %v398
        %v400 = vrot.slane %v392, 1
        %v401 = vsel %vm396, %v398, %v400
        %v404 = vadd.f32 %v388, %v399
        %v405 = vadd.f32 %v389, %v401
        %407 = vrot.lane.b32.xlu0 %v329, 4
        %v408 = vpop.permute.xlu0 %407
        %v410 = vmul.f32 %v351, %v408
        %v411 = vmul.f32 %v352, %v408
        %v412 = vmul.f32 %v353, %v408
        %v416 = vrot.slane %v410, 1
        %v417 = vrot.slane %v411, 1
        %v418 = vsel %vm396, %v416, %v417
        %v419 = vrot.slane %v412, 1
        %v420 = vsel %vm396, %v417, %v419
        %421 = vrot.lane.b32.xlu0 %v418, 124
        %v422 = vpop.permute.xlu0 %421
        %423 = vrot.lane.b32.xlu0 %v420, 124
        %v424 = vpop.permute.xlu0 %423
        %v427 = vadd.f32 %v404, %v422
        %v428 = vadd.f32 %v405, %v424
        %430 = vrot.lane.b32.xlu0 %v334, 8
        %v431 = vpop.permute.xlu0 %430
        %v433 = vmul.f32 %v351, %v431
        %v434 = vmul.f32 %v352, %v431
        %v435 = vmul.f32 %v353, %v431
        %v439 = vrot.slane %v433, 1
        %v440 = vrot.slane %v434, 1
        %v441 = vsel %vm396, %v439, %v440
        %v442 = vrot.slane %v435, 1
        %v443 = vsel %vm396, %v440, %v442
        %444 = vrot.lane.b32.xlu0 %v441, 120
        %v445 = vpop.permute.xlu0 %444
        %446 = vrot.lane.b32.xlu0 %v443, 120
        %v447 = vpop.permute.xlu0 %446
        %v450 = vadd.f32 %v427, %v445
        %v451 = vadd.f32 %v428, %v447
        %v452 = vmul.f32 %v351, %v339
        %v453 = vmul.f32 %v352, %v339
        %v454 = vmul.f32 %v353, %v339
        %vm458 = vcmask 1045504
        %v459 = vrot.slane %v452, 2
        %v460 = vrot.slane %v453, 2
        %v461 = vsel %vm458, %v459, %v460
        %v462 = vrot.slane %v454, 2
        %v463 = vsel %vm458, %v460, %v462
        %v466 = vadd.f32 %v450, %v461
        %v467 = vadd.f32 %v451, %v463
        %469 = vrot.lane.b32.xlu0 %v344, 4
        %v470 = vpop.permute.xlu0 %469
        %v472 = vmul.f32 %v351, %v470
        %v473 = vmul.f32 %v352, %v470
        %v474 = vmul.f32 %v353, %v470
        %v478 = vrot.slane %v472, 2
        %v479 = vrot.slane %v473, 2
        %v480 = vsel %vm458, %v478, %v479
        %v481 = vrot.slane %v474, 2
        %v482 = vsel %vm458, %v479, %v481
        %483 = vrot.lane.b32.xlu0 %v480, 124
        %v484 = vpop.permute.xlu0 %483
        %485 = vrot.lane.b32.xlu0 %v482, 124
        %v486 = vpop.permute.xlu0 %485
        %v489 = vadd.f32 %v466, %v484
        %v490 = vadd.f32 %v467, %v486
        %492 = vrot.lane.b32.xlu0 %v349, 8
        %v493 = vpop.permute.xlu0 %492
        %v495 = vmul.f32 %v351, %v493
        %v496 = vmul.f32 %v352, %v493
        %v497 = vmul.f32 %v353, %v493
        %v501 = vrot.slane %v495, 2
        %v502 = vrot.slane %v496, 2
        %v503 = vsel %vm458, %v501, %v502
        %v504 = vrot.slane %v497, 2
        %v505 = vsel %vm458, %v502, %v504
        %506 = vrot.lane.b32.xlu0 %v503, 120
        %v507 = vpop.permute.xlu0 %506
        %508 = vrot.lane.b32.xlu0 %v505, 120
        %v509 = vpop.permute.xlu0 %508
        %v512 = vadd.f32 %v489, %v507
        %v513 = vadd.f32 %v490, %v509
        %v515 = vlaneseq
        %v516 = vshrl.u32 %v515, 7
        %v517 = vsub.s32 0, %v516
        %v518 = vrot.slane %v301, %v517
        %v520 = vmul.f32 %v512, %v518
        %v521 = vmul.f32 %v513, %v518
        %v523 = vlaneseq
        %v524 = vshrl.u32 %v523, 7
        %v525 = vsub.s32 0, %v524
        %v526 = vrot.slane %v302, %v525
        %v528 = vadd.f32 %v520, %v526
        %v529 = vadd.f32 %v521, %v526
        %v530 = vmax.f32 %v528, 0.0
        %v531 = vmax.f32 %v529, 0.0
        %vm532 = vcmask 523264
        %v534 = vsel %vm532, %v530, 0
        %v537 = vsel %vm532, %v531, 0
        %539 = vmatprep.subr.mxu0 0.0
        %540 = vmatpush1.msra.mxu0 0.0
        %541 = vmatprep.subr.mxu0 0.0
        %542 = vmatpush1.msra.mxu0 0.0
        %543 = vmatprep.subr.mxu0 0.0
        %544 = vmatpush1.msra.mxu0 0.0
        %545 = vmatprep.subr.mxu0 0.0
        %546 = vmatpush1.msra.mxu0 0.0
        %547 = vmatprep.subr.mxu0 0.0
        %548 = vmatpush1.msra.mxu0 0.0
        %549 = vmatprep.subr.mxu0 0.0
        %550 = vmatpush1.msra.mxu0 0.0
        %551 = vmatprep.subr.mxu0 0.0
        %552 = vmatpush1.msra.mxu0 0.0
        %553 = vmatprep.subr.mxu0 0.0
        %554 = vmatpush1.msra.mxu0 0.0
        %555 = vmatprep.subr.mxu0 0.0
        %556 = vmatpush1.msra.mxu0 %v300
        %557 = vmatprep.subr.mxu0 0.0
        %558 = vmatpush1.msra.mxu0 %v299
        %559 = vmatprep.subr.mxu0 0.0
        %560 = vmatpush1.msra.mxu0 %v298
        %561 = vmatprep.subr.mxu0 0.0
        %562 = vmatpush1.msra.mxu0 %v297
        %563 = vmatprep.subr.mxu0 0.0
        %564 = vmatpush1.msra.mxu0 %v296
        %565 = vmatprep.subr.mxu0 0.0
        %566 = vmatpush1.msra.mxu0 %v295
        %567 = vmatprep.subr.mxu0 0.0
        %568 = vmatpush1.msra.mxu0 %v294
        %569 = vmatprep.subr.mxu0 0.0
        %570 = vmatpush1.msra.mxu0 %v293
        %571 = vmatprep.subr.mxu0 0.0
        %572 = vmatpush2.msra.mxu0 0.0
        %573 = vmatprep.subr.mxu0 0.0
        %574 = vmatpush2.msra.mxu0 0.0
        %575 = vmatprep.subr.mxu0 0.0
        %576 = vmatpush2.msra.mxu0 0.0
        %577 = vmatprep.subr.mxu0 0.0
        %578 = vmatpush2.msra.mxu0 0.0
        %579 = vmatprep.subr.mxu0 0.0
        %580 = vmatpush2.msra.mxu0 0.0
        %581 = vmatprep.subr.mxu0 0.0
        %582 = vmatpush2.msra.mxu0 0.0
        %583 = vmatprep.subr.mxu0 0.0
        %584 = vmatpush2.msra.mxu0 0.0
        %585 = vmatprep.subr.mxu0 0.0
        %586 = vmatpush2.msra.mxu0 0.0
        %587 = vmatprep.subr.mxu0 0.0
        %588 = vmatpush2.msra.mxu0 0.0
        %589 = vmatprep.subr.mxu0 0.0
        %590 = vmatpush2.msra.mxu0 0.0
        %591 = vmatprep.subr.mxu0 0.0
        %592 = vmatpush2.msra.mxu0 0.0
        %593 = vmatprep.subr.mxu0 0.0
        %594 = vmatpush2.msra.mxu0 0.0
        %595 = vmatprep.subr.mxu0 0.0
        %596 = vmatpush2.msra.mxu0 0.0
        %597 = vmatprep.subr.mxu0 0.0
        %598 = vmatpush2.msra.mxu0 0.0
        %599 = vmatprep.subr.mxu0 0.0
        %600 = vmatpush2.msra.mxu0 0.0
        %601 = vmatprep.subr.mxu0 0.0
        %602 = vmatpush2.msra.mxu0 0.0
        %603 = vmatprep.mubr.f32.mxu0 0.0
        %604 = vmatmul.mubr.f32.gmra.mxu0 %v534
        %v605 = vpop.f32.mrf.mxu0
        %v606 = vadd.f32 0.0, %v605
        %v607 = vpop.f32.mrf.mxu0
        %608 = vmatprep.mubr.f32.mxu0 0.0
        %609 = vmatmul.mubr.f32.gmra.mxu0 %v537
        %v610 = vpop.f32.mrf.mxu0
        %v611 = vadd.f32 0.0, %v610
        %v612 = vpop.f32.mrf.mxu0
        %613 = vdwg.mxu0
        %v615 = vlaneseq
        %v616 = vshrl.u32 %v615, 7
        %v617 = vsub.s32 0, %v616
        %v618 = vrot.slane %v303, %v617
        %v620 = vmul.f32 %v606, %v618
        %v621 = vmul.f32 %v611, %v618
        %v623 = vlaneseq
        %v624 = vshrl.u32 %v623, 7
        %v625 = vsub.s32 0, %v624
        %v626 = vrot.slane %v304, %v625
        %v628 = vadd.f32 %v620, %v626
        %v629 = vadd.f32 %v621, %v626
        %v630 = vmax.f32 %v628, 0.0
        %v631 = vmax.f32 %v629, 0.0
        %632 = vst [vmem:[%s285] sm:$0xff] %v630
        %633 = vst [vmem:[%s285 + $0x8] sm:$0xff] %v631
        %s634 = sand.u32 %s195, 1
        %s635 = scalar_lea.sflag [#allocation3], %s634
        %s636 = sand.u32 %s195, 1
        %s637 = smul.addr %s636, 16
        %s638 = scalar_lea.vmem [#allocation2], %s637
        // Predicated region
        $region49: #{tpu_custom_call.1} parent=47 // pred_check
          %p639 = pneg %p205
        $region50: #{tpu_custom_call.1} parent=47 // pred_check_branch
          %641 = sbr.rel (%p639) target = $region52
        $region51: #{tpu_custom_call.1} parent=47 // pred_region
          %s642 = smul.u32 2, %s26
          %s644 = ssub.s32 256, 256
          %645 = vsyncadd %s635, %s644
          %s646 = smul.addr %s25, 2
          %s647 = sadd.s32 %s642, %s646
          %s648 = smul.addr %s647, 128
          %s649 = scalar_lea.hbm %s7, %s648
          %s650 = sshll.u32 %s638, 4
          %s651 = int_to_ptr.vmem [resolvable:$true] %s650
          %656 = dma.vmem_to_hbm [thread:$0]  %s651, 256, %s649, %s635, 128, 128, 8
        $region52: #{tpu_custom_call.1} parent=47 // pred_fallthru
          _
      $region48: #{tpu_custom_call.1} parent=5 // pred_fallthru
        _
      %p657 = scmp.le.s32.totalorder 2, %s16
      // Predicated region
      $region53: #{tpu_custom_call.1} parent=5 // pred_check
        %p658 = pneg %p657
      $region54: #{tpu_custom_call.1} parent=5 // pred_check_branch
        %660 = sbr.rel (%p658) target = $region56
      $region55: #{tpu_custom_call.1} parent=5 // pred_region
        %s661 = ssub.s32 %s16, 2
        // Predicated region
        $region57: #{tpu_custom_call.1} parent=55 // pred_check
          %p662 = pneg %p211
        $region58: #{tpu_custom_call.1} parent=55 // pred_check_branch
          %664 = sbr.rel (%p662) target = $region60
        $region59: #{tpu_custom_call.1} parent=55 // pred_region
          %s665 = sand.u32 %s196, 1
          %s666 = scalar_lea.sflag [#allocation3], %s665
          %s667 = sand.u32 %s196, 1
          %s668 = smul.addr %s667, 16
          %s669 = scalar_lea.vmem [#allocation2], %s668
          %670 = dma.done %s666, 256
        $region60: #{tpu_custom_call.1} parent=55 // pred_fallthru
          _
      $region56: #{tpu_custom_call.1} parent=5 // pred_fallthru
        _
    $region6: #{tpu_custom_call.1} parent=1 // loop_footer
      %s20 = sadd.s32 1, %s16
    $region7: #{tpu_custom_call.1} parent=1 // loop_footer_branch
      %15 = sbr.rel target = $region3
    $region8: #{tpu_custom_call.1} parent=1 // loop_exit
      _
    %671 = vsyncpa [#allocation3], 1
    %s672 = scalar_lea.sflag [#allocation3], 1
    %673 = vsyncpa %s672, 1

// kernel: tpu_custom_call.1
$region0: #{tpu_custom_call.1}
  #allocation0 [shape = 'u32[]', space=smem, size = 0x4, offset = 0x4, fixed_abs, tag = 'smem constant byte address 0x4 - core index']
  #allocation1 [shape = 'u32[144,128]{1,0:T(1,128)}', space=vmem, size = 0x12000, scoped, tag = 'internal scratch']
  %s0 = inlined_call_operand.vmem [shape: f32[2,18,72], index: 0, kind: input, shape index: {}]
  %s1 = inlined_call_operand.vmem [shape: f32[9,64], index: 1, kind: input, shape index: {}]
  %s2 = inlined_call_operand.vmem [shape: f32[64,128], index: 2, kind: input, shape index: {}]
  %s3 = inlined_call_operand.vmem [shape: f32[1,64], index: 3, kind: input, shape index: {}]
  %s4 = inlined_call_operand.vmem [shape: f32[1,64], index: 4, kind: input, shape index: {}]
  %s5 = inlined_call_operand.vmem [shape: f32[1,128], index: 5, kind: input, shape index: {}]
  %s6 = inlined_call_operand.vmem [shape: f32[1,128], index: 6, kind: input, shape index: {}]
  %s7 = inlined_call_operand.hbm [shape: f32[2,16,128], index: 7, kind: output, shape index: {}]
  %s8 = sld [smem:[#allocation0]]
  $region61: #{tpu_custom_call.1} parent=0
    _
  %s10 = ssub.s32 1, %s8
  %s11 = scalar_select 0, %s10, %s8
  $region1: #{tpu_custom_call.1} parent=0
    #allocation2 [shape = 'u8[16384]{0}', space=vmem, size = 0x4000, scoped, tag = 'output window, operand 0']
    #allocation3 [shape = 's32[2]{0}', space=sflag, size = 0x8, scoped, tag = 'scoped memory for tpu_custom_call.1']
    %12 = vsyncpa [#allocation3], 0
    %s13 = scalar_lea.sflag [#allocation3], 1
    %14 = vsyncpa %s13, 0
    loop: start=0, step=1, limit=4
    $region2: #{tpu_custom_call.1} parent=1 // loop_pre_header
      _
    $region3: #{tpu_custom_call.1} parent=1 // loop_header
      %s16 = sphi 0, %s20
      %p17 = scmp.ge.s32.totalorder %s16, 4
      %s23 = sphi 0, %s35
      %s24 = sphi 0, %s31
      %s25 = sphi 0, %s23
      %s26 = sphi 0, %s24
      %s27 = sphi 0, %s25
      %s28 = sphi 0, %s26
      %s38 = sphi 0, %s40
      %s41 = sphi 0, %s38
      %s42 = sphi 0, %s41
      %s58 = sphi 0, %s42
      %s62 = sphi 0, %s62
      %s64 = sphi 0, %s62
      %s65 = sphi 0, %s64
      %s79 = sphi 0, %s65
      %s83 = sphi 0, %s83
      %s85 = sphi 0, %s83
      %s86 = sphi 0, %s85
      %s100 = sphi 0, %s86
      %s104 = sphi 0, %s104
      %s106 = sphi 0, %s104
      %s107 = sphi 0, %s106
      %s121 = sphi 0, %s107
      %s125 = sphi 0, %s125
      %s127 = sphi 0, %s125
      %s128 = sphi 0, %s127
      %s142 = sphi 0, %s128
      %s146 = sphi 0, %s146
      %s148 = sphi 0, %s146
      %s149 = sphi 0, %s148
      %s163 = sphi 0, %s149
      %s167 = sphi 0, %s167
      %s169 = sphi 0, %s167
      %s170 = sphi 0, %s169
      %s184 = sphi 0, %s170
      %s192 = sphi 0, %s194
      %s195 = sphi 0, %s192
      %s196 = sphi 0, %s195
      %s212 = sphi 0, %s196
    $region4: #{tpu_custom_call.1} parent=1 // loop_header_branch
      %19 = sbr.rel (%p17) target = $region8
    $region5: #{tpu_custom_call.1} parent=1 // loop_body
      %s21 = ssub.s32 %s16, 1
      %s22 = ssub.s32 %s16, 2
      %s29 = sadd.s32 1, %s24
      %p30 = scmp.ge.s32.totalorder %s29, 1
      %s31 = scalar_select %p30, 0, %s29
      %s32 = sadd.s32 1, %s23
      %s33 = scalar_select %p30, %s32, %s23
      %p34 = scmp.ge.s32.totalorder %s33, 2
      %s35 = scalar_select %p34, 0, %s33
      %s36 = ssub.s32 %s23, %s35
      %p37 = scmp.eq.s32.totalorder %s36, 0
      %s39 = sadd.s32 %s38, 1
      %s40 = scalar_select %p37, %s38, %s39
      %p43 = pneg %p37
      %p44 = scmp.eq.s32.totalorder %s16, 1
      %p45 = por %p43, %p44
      %p46 = scmp.ne.s32.totalorder %s38, %s41
      %p47 = scmp.eq.s32.totalorder %s16, 0
      %p48 = por %p46, %p47
      %p49 = scmp.ne.s32.totalorder %s38, %s41
      %p50 = scmp.eq.s32.totalorder %s21, 1
      %p51 = por %p49, %p50
      %p52 = scmp.ne.s32.totalorder %s41, %s42
      %p53 = scmp.eq.s32.totalorder %s21, 0
      %p54 = por %p52, %p53
      %p55 = scmp.ne.s32.totalorder %s41, %s42
      %p56 = scmp.eq.s32.totalorder %s22, 1
      %p57 = por %p55, %p56
      %p59 = scmp.ne.s32.totalorder %s42, %s58
      %p60 = scmp.eq.s32.totalorder %s22, 0
      %p61 = por %p59, %p60
      %s63 = sadd.s32 %s62, 1
      %p66 = scmp.eq.s32.totalorder %s16, 1
      %p67 = scmp.ne.s32.totalorder %s62, %s64
      %p68 = scmp.eq.s32.totalorder %s16, 0
      %p69 = por %p67, %p68
      %p70 = scmp.ne.s32.totalorder %s62, %s64
      %p71 = scmp.eq.s32.totalorder %s21, 1
      %p72 = por %p70, %p71
      %p73 = scmp.ne.s32.totalorder %s64, %s65
      %p74 = scmp.eq.s32.totalorder %s21, 0
      %p75 = por %p73, %p74
      %p76 = scmp.ne.s32.totalorder %s64, %s65
      %p77 = scmp.eq.s32.totalorder %s22, 1
      %p78 = por %p76, %p77
      %p80 = scmp.ne.s32.totalorder %s65, %s79
      %p81 = scmp.eq.s32.totalorder %s22, 0
      %p82 = por %p80, %p81
      %s84 = sadd.s32 %s83, 1
      %p87 = scmp.eq.s32.totalorder %s16, 1
      %p88 = scmp.ne.s32.totalorder %s83, %s85
      %p89 = scmp.eq.s32.totalorder %s16, 0
      %p90 = por %p88, %p89
      %p91 = scmp.ne.s32.totalorder %s83, %s85
      %p92 = scmp.eq.s32.totalorder %s21, 1
      %p93 = por %p91, %p92
      %p94 = scmp.ne.s32.totalorder %s85, %s86
      %p95 = scmp.eq.s32.totalorder %s21, 0
      %p96 = por %p94, %p95
      %p97 = scmp.ne.s32.totalorder %s85, %s86
      %p98 = scmp.eq.s32.totalorder %s22, 1
      %p99 = por %p97, %p98
      %p101 = scmp.ne.s32.totalorder %s86, %s100
      %p102 = scmp.eq.s32.totalorder %s22, 0
      %p103 = por %p101, %p102
      %s105 = sadd.s32 %s104, 1
      %p108 = scmp.eq.s32.totalorder %s16, 1
      %p109 = scmp.ne.s32.totalorder %s104, %s106
      %p110 = scmp.eq.s32.totalorder %s16, 0
      %p111 = por %p109, %p110
      %p112 = scmp.ne.s32.totalorder %s104, %s106
      %p113 = scmp.eq.s32.totalorder %s21, 1
      %p114 = por %p112, %p113
      %p115 = scmp.ne.s32.totalorder %s106, %s107
      %p116 = scmp.eq.s32.totalorder %s21, 0
      %p117 = por %p115, %p116
      %p118 = scmp.ne.s32.totalorder %s106, %s107
      %p119 = scmp.eq.s32.totalorder %s22, 1
      %p120 = por %p118, %p119
      %p122 = scmp.ne.s32.totalorder %s107, %s121
      %p123 = scmp.eq.s32.totalorder %s22, 0
      %p124 = por %p122, %p123
      %s126 = sadd.s32 %s125, 1
      %p129 = scmp.eq.s32.totalorder %s16, 1
      %p130 = scmp.ne.s32.totalorder %s125, %s127
      %p131 = scmp.eq.s32.totalorder %s16, 0
      %p132 = por %p130, %p131
      %p133 = scmp.ne.s32.totalorder %s125, %s127
      %p134 = scmp.eq.s32.totalorder %s21, 1
      %p135 = por %p133, %p134
      %p136 = scmp.ne.s32.totalorder %s127, %s128
      %p137 = scmp.eq.s32.totalorder %s21, 0
      %p138 = por %p136, %p137
      %p139 = scmp.ne.s32.totalorder %s127, %s128
      %p140 = scmp.eq.s32.totalorder %s22, 1
      %p141 = por %p139, %p140
      %p143 = scmp.ne.s32.totalorder %s128, %s142
      %p144 = scmp.eq.s32.totalorder %s22, 0
      %p145 = por %p143, %p144
      %s147 = sadd.s32 %s146, 1
      %p150 = scmp.eq.s32.totalorder %s16, 1
      %p151 = scmp.ne.s32.totalorder %s146, %s148
      %p152 = scmp.eq.s32.totalorder %s16, 0
      %p153 = por %p151, %p152
      %p154 = scmp.ne.s32.totalorder %s146, %s148
      %p155 = scmp.eq.s32.totalorder %s21, 1
      %p156 = por %p154, %p155
      %p157 = scmp.ne.s32.totalorder %s148, %s149
      %p158 = scmp.eq.s32.totalorder %s21, 0
      %p159 = por %p157, %p158
      %p160 = scmp.ne.s32.totalorder %s148, %s149
      %p161 = scmp.eq.s32.totalorder %s22, 1
      %p162 = por %p160, %p161
      %p164 = scmp.ne.s32.totalorder %s149, %s163
      %p165 = scmp.eq.s32.totalorder %s22, 0
      %p166 = por %p164, %p165
      %s168 = sadd.s32 %s167, 1
      %p171 = scmp.eq.s32.totalorder %s16, 1
      %p172 = scmp.ne.s32.totalorder %s167, %s169
      %p173 = scmp.eq.s32.totalorder %s16, 0
      %p174 = por %p172, %p173
      %p175 = scmp.ne.s32.totalorder %s167, %s169
      %p176 = scmp.eq.s32.totalorder %s21, 1
      %p177 = por %p175, %p176
      %p178 = scmp.ne.s32.totalorder %s169, %s170
      %p179 = scmp.eq.s32.totalorder %s21, 0
      %p180 = por %p178, %p179
      %p181 = scmp.ne.s32.totalorder %s169, %s170
      %p182 = scmp.eq.s32.totalorder %s22, 1
      %p183 = por %p181, %p182
      %p185 = scmp.ne.s32.totalorder %s170, %s184
      %p186 = scmp.eq.s32.totalorder %s22, 0
      %p187 = por %p185, %p186
      %s188 = ssub.s32 %s23, %s35
      %s189 = ssub.s32 %s24, %s31
      %s190 = sor.u32 %s188, %s189
      %p191 = scmp.eq.s32.totalorder %s190, 0
      %s193 = sadd.s32 %s192, 1
      %s194 = scalar_select %p191, %s192, %s193
      %p197 = pneg %p191
      %p198 = scmp.eq.s32.totalorder %s16, 1
      %p199 = por %p197, %p198
      %p200 = scmp.ne.s32.totalorder %s192, %s195
      %p201 = scmp.eq.s32.totalorder %s16, 0
      %p202 = por %p200, %p201
      %p203 = scmp.ne.s32.totalorder %s192, %s195
      %p204 = scmp.eq.s32.totalorder %s21, 1
      %p205 = por %p203, %p204
      %p206 = scmp.ne.s32.totalorder %s195, %s196
      %p207 = scmp.eq.s32.totalorder %s21, 0
      %p208 = por %p206, %p207
      %p209 = scmp.ne.s32.totalorder %s195, %s196
      %p210 = scmp.eq.s32.totalorder %s22, 1
      %p211 = por %p209, %p210
      %p213 = scmp.ne.s32.totalorder %s196, %s212
      %p214 = scmp.eq.s32.totalorder %s22, 0
      %p215 = por %p213, %p214
      %p216 = scmp.le.s32.totalorder 1, %s16
      %p217 = scmp.lt.s32.totalorder %s16, 3
      %p218 = pnand %p216, %p217
      %p219 = pneg %p218
      // Predicated region
      $region9: #{tpu_custom_call.1} parent=5 // pred_check
        _
      $region10: #{tpu_custom_call.1} parent=5 // pred_check_branch
        %221 = sbr.rel (%p218) target = $region12
      $region11: #{tpu_custom_call.1} parent=5 // pred_region
        %s222 = ssub.s32 %s16, 1
        // Predicated region
        $region13: #{tpu_custom_call.1} parent=11 // pred_check
          %p223 = pneg %p75
        $region14: #{tpu_custom_call.1} parent=11 // pred_check_branch
          %225 = sbr.rel (%p223) target = $region16
        $region15: #{tpu_custom_call.1} parent=11 // pred_region
          _
        $region16: #{tpu_custom_call.1} parent=11 // pred_fallthru
          _
        // Predicated region
        $region17: #{tpu_custom_call.1} parent=11 // pred_check
          %p226 = pneg %p96
        $region18: #{tpu_custom_call.1} parent=11 // pred_check_branch
          %228 = sbr.rel (%p226) target = $region20
        $region19: #{tpu_custom_call.1} parent=11 // pred_region
          _
        $region20: #{tpu_custom_call.1} parent=11 // pred_fallthru
          _
        // Predicated region
        $region21: #{tpu_custom_call.1} parent=11 // pred_check
          %p229 = pneg %p117
        $region22: #{tpu_custom_call.1} parent=11 // pred_check_branch
          %231 = sbr.rel (%p229) target = $region24
        $region23: #{tpu_custom_call.1} parent=11 // pred_region
          _
        $region24: #{tpu_custom_call.1} parent=11 // pred_fallthru
          _
        // Predicated region
        $region25: #{tpu_custom_call.1} parent=11 // pred_check
          %p232 = pneg %p138
        $region26: #{tpu_custom_call.1} parent=11 // pred_check_branch
          %234 = sbr.rel (%p232) target = $region28
        $region27: #{tpu_custom_call.1} parent=11 // pred_region
          _
        $region28: #{tpu_custom_call.1} parent=11 // pred_fallthru
          _
        // Predicated region
        $region29: #{tpu_custom_call.1} parent=11 // pred_check
          %p235 = pneg %p159
        $region30: #{tpu_custom_call.1} parent=11 // pred_check_branch
          %237 = sbr.rel (%p235) target = $region32
        $region31: #{tpu_custom_call.1} parent=11 // pred_region
          _
        $region32: #{tpu_custom_call.1} parent=11 // pred_fallthru
          _
        // Predicated region
        $region33: #{tpu_custom_call.1} parent=11 // pred_check
          %p238 = pneg %p180
        $region34: #{tpu_custom_call.1} parent=11 // pred_check_branch
          %240 = sbr.rel (%p238) target = $region36
        $region35: #{tpu_custom_call.1} parent=11 // pred_region
          _
        $region36: #{tpu_custom_call.1} parent=11 // pred_fallthru
          _
      $region12: #{tpu_custom_call.1} parent=5 // pred_fallthru
        _
      %p241 = scmp.lt.s32.totalorder %s16, 2
      // Predicated region
      $region37: #{tpu_custom_call.1} parent=5 // pred_check
        %p242 = pneg %p241
      $region38: #{tpu_custom_call.1} parent=5 // pred_check_branch
        %244 = sbr.rel (%p242) target = $region40
      $region39: #{tpu_custom_call.1} parent=5 // pred_region
        // Predicated region
        $region41: #{tpu_custom_call.1} parent=39 // pred_check
          %p245 = pneg %p48
        $region42: #{tpu_custom_call.1} parent=39 // pred_check_branch
          %247 = sbr.rel (%p245) target = $region44
        $region43: #{tpu_custom_call.1} parent=39 // pred_region
          %p248 = scmp.lt.s32.totalorder %s23, 1
          %s249 = scalar_select %p248, %s23, 1
          %s250 = smul.addr %s249, 3
          %s251 = smul.addr %s250, 8
          %s252 = scalar_lea.vmem %s0, %s251
        $region44: #{tpu_custom_call.1} parent=39 // pred_fallthru
          _
      $region40: #{tpu_custom_call.1} parent=5 // pred_fallthru
        _
      %p253 = scmp.le.s32.totalorder 1, %s16
      %p254 = scmp.lt.s32.totalorder %s16, 3
      %p255 = pnand %p253, %p254
      %p256 = pneg %p255
      // Predicated region
      $region45: #{tpu_custom_call.1} parent=5 // pred_check
        _
      $region46: #{tpu_custom_call.1} parent=5 // pred_check_branch
        %258 = sbr.rel (%p255) target = $region48
      $region47: #{tpu_custom_call.1} parent=5 // pred_region
        %s259 = ssub.s32 %s16, 1
        %p260 = scmp.lt.s32.totalorder %s25, 1
        %s261 = scalar_select %p260, %s25, 1
        %s262 = smul.addr %s261, 3
        %s263 = smul.addr %s262, 8
        %s264 = scalar_lea.vmem %s0, %s263
        %p265 = pneg %p54
        %p266 = pneg %p51
        %p267 = pneg %p75
        %p268 = pneg %p72
        %p269 = pneg %p96
        %p270 = pneg %p93
        %p271 = pneg %p117
        %p272 = pneg %p114
        %p273 = pneg %p138
        %p274 = pneg %p135
        %p275 = pneg %p159
        %p276 = pneg %p156
        %p277 = pneg %p180
        %p278 = pneg %p177
        %p279 = pneg %p208
        %p280 = pneg %p205
        %s281 = sand.u32 %s195, 1
        %s282 = scalar_lea.sflag [#allocation3], %s281
        %s283 = sand.u32 %s195, 1
        %s284 = smul.addr %s283, 16
        %s285 = scalar_lea.vmem [#allocation2], %s284
        %p286 = scmp.lt.s32.totalorder %s25, 1
        %s287 = scalar_select %p286, %s25, 1
        %s288 = smul.addr %s287, 3
        %s289 = smul.addr %s288, 8
        %s290 = scalar_lea.vmem %s0, %s289
        %s291 = smul.u32 2, %s26
        %s292 = smul.u32 %s26, 16
        %v293 = vld [vmem:[%s2] sm:$0xff]
        %v294 = vld [vmem:[%s2 + $0x8] sm:$0xff]
        %v295 = vld [vmem:[%s2 + $0x10] sm:$0xff]
        %v296 = vld [vmem:[%s2 + $0x18] sm:$0xff]
        %v297 = vld [vmem:[%s2 + $0x20] sm:$0xff]
        %v298 = vld [vmem:[%s2 + $0x28] sm:$0xff]
        %v299 = vld [vmem:[%s2 + $0x30] sm:$0xff]
        %v300 = vld [vmem:[%s2 + $0x38] sm:$0xff]
        %v301 = vld [vmem:[%s3] sm:$0x1]
        %v302 = vld [vmem:[%s4] sm:$0x1]
        %v303 = vld [vmem:[%s5] sm:$0x1]
        %v304 = vld [vmem:[%s6] sm:$0x1]
        %v305 = vld [vmem:[%s1] sm:$0x1]
        %v306 = vlaneseq
        %v307 = vshrl.u32 %v306, 7
        %v308 = vsub.s32 0, %v307
        %v309 = vrot.slane %v305, %v308
        %v310 = vld [vmem:[%s1 + $0x1] sm:$0x1]
        %v311 = vlaneseq
        %v312 = vshrl.u32 %v311, 7
        %v313 = vsub.s32 0, %v312
        %v314 = vrot.slane %v310, %v313
        %v315 = vld [vmem:[%s1 + $0x2] sm:$0x1]
        %v316 = vlaneseq
        %v317 = vshrl.u32 %v316, 7
        %v318 = vsub.s32 0, %v317
        %v319 = vrot.slane %v315, %v318
        %v320 = vld [vmem:[%s1 + $0x3] sm:$0x1]
        %v321 = vlaneseq
        %v322 = vshrl.u32 %v321, 7
        %v323 = vsub.s32 0, %v322
        %v324 = vrot.slane %v320, %v323
        %v325 = vld [vmem:[%s1 + $0x4] sm:$0x1]
        %v326 = vlaneseq
        %v327 = vshrl.u32 %v326, 7
        %v328 = vsub.s32 0, %v327
        %v329 = vrot.slane %v325, %v328
        %v330 = vld [vmem:[%s1 + $0x5] sm:$0x1]
        %v331 = vlaneseq
        %v332 = vshrl.u32 %v331, 7
        %v333 = vsub.s32 0, %v332
        %v334 = vrot.slane %v330, %v333
        %v335 = vld [vmem:[%s1 + $0x6] sm:$0x1]
        %v336 = vlaneseq
        %v337 = vshrl.u32 %v336, 7
        %v338 = vsub.s32 0, %v337
        %v339 = vrot.slane %v335, %v338
        %v340 = vld [vmem:[%s1 + $0x7] sm:$0x1]
        %v341 = vlaneseq
        %v342 = vshrl.u32 %v341, 7
        %v343 = vsub.s32 0, %v342
        %v344 = vrot.slane %v340, %v343
        %v345 = vld [vmem:[%s1 + $0x8] sm:$0x1]
        %v346 = vlaneseq
        %v347 = vshrl.u32 %v346, 7
        %v348 = vsub.s32 0, %v347
        %v349 = vrot.slane %v345, %v348
        %s350 = scalar_lea.vmem %s290, %s292
        %v351 = vld [vmem:[%s350] sm:$0xff]
        %v352 = vld [vmem:[%s350 + $0x8] sm:$0xff]
        %v353 = vld [vmem:[%s350 + $0x10] sm:$0x3]
        %v354 = vmul.f32 %v351, %v309
        %v355 = vmul.f32 %v352, %v309
        %v356 = vadd.f32 %v354, 0.0
        %v357 = vadd.f32 %v355, 0.0
        %359 = vrot.lane.b32.xlu0 %v314, 4
        %v360 = vpop.permute.xlu0 %359
        %v362 = vmul.f32 %v351, %v360
        %v363 = vmul.f32 %v352, %v360
        %366 = vrot.lane.b32.xlu0 %v362, 124
        %v367 = vpop.permute.xlu0 %366
        %368 = vrot.lane.b32.xlu0 %v363, 124
        %v369 = vpop.permute.xlu0 %368
        %v372 = vadd.f32 %v356, %v367
        %v373 = vadd.f32 %v357, %v369
        %375 = vrot.lane.b32.xlu0 %v319, 8
        %v376 = vpop.permute.xlu0 %375
        %v378 = vmul.f32 %v351, %v376
        %v379 = vmul.f32 %v352, %v376
        %382 = vrot.lane.b32.xlu0 %v378, 120
        %v383 = vpop.permute.xlu0 %382
        %384 = vrot.lane.b32.xlu0 %v379, 120
        %v385 = vpop.permute.xlu0 %384
        %v388 = vadd.f32 %v372, %v383
        %v389 = vadd.f32 %v373, %v385
        %v390 = vmul.f32 %v351, %v324
        %v391 = vmul.f32 %v352, %v324
        %v392 = vmul.f32 %v353, %v324
        %vm396 = vcmask 1046528
        %v397 = vrot.slane %v390, 1
        %v398 = vrot.slane %v391, 1
        %v399 = vsel %vm396, %v397, %v398
        %v400 = vrot.slane %v392, 1
        %v401 = vsel %vm396, %v398, %v400
        %v404 = vadd.f32 %v388, %v399
        %v405 = vadd.f32 %v389, %v401
        %407 = vrot.lane.b32.xlu0 %v329, 4
        %v408 = vpop.permute.xlu0 %407
        %v410 = vmul.f32 %v351, %v408
        %v411 = vmul.f32 %v352, %v408
        %v412 = vmul.f32 %v353, %v408
        %v416 = vrot.slane %v410, 1
        %v417 = vrot.slane %v411, 1
        %v418 = vsel %vm396, %v416, %v417
        %v419 = vrot.slane %v412, 1
        %v420 = vsel %vm396, %v417, %v419
        %421 = vrot.lane.b32.xlu0 %v418, 124
        %v422 = vpop.permute.xlu0 %421
        %423 = vrot.lane.b32.xlu0 %v420, 124
        %v424 = vpop.permute.xlu0 %423
        %v427 = vadd.f32 %v404, %v422
        %v428 = vadd.f32 %v405, %v424
        %430 = vrot.lane.b32.xlu0 %v334, 8
        %v431 = vpop.permute.xlu0 %430
        %v433 = vmul.f32 %v351, %v431
        %v434 = vmul.f32 %v352, %v431
        %v435 = vmul.f32 %v353, %v431
        %v439 = vrot.slane %v433, 1
        %v440 = vrot.slane %v434, 1
        %v441 = vsel %vm396, %v439, %v440
        %v442 = vrot.slane %v435, 1
        %v443 = vsel %vm396, %v440, %v442
        %444 = vrot.lane.b32.xlu0 %v441, 120
        %v445 = vpop.permute.xlu0 %444
        %446 = vrot.lane.b32.xlu0 %v443, 120
        %v447 = vpop.permute.xlu0 %446
        %v450 = vadd.f32 %v427, %v445
        %v451 = vadd.f32 %v428, %v447
        %v452 = vmul.f32 %v351, %v339
        %v453 = vmul.f32 %v352, %v339
        %v454 = vmul.f32 %v353, %v339
        %vm458 = vcmask 1045504
        %v459 = vrot.slane %v452, 2
        %v460 = vrot.slane %v453, 2
        %v461 = vsel %vm458, %v459, %v460
        %v462 = vrot.slane %v454, 2
        %v463 = vsel %vm458, %v460, %v462
        %v466 = vadd.f32 %v450, %v461
        %v467 = vadd.f32 %v451, %v463
        %469 = vrot.lane.b32.xlu0 %v344, 4
        %v470 = vpop.permute.xlu0 %469
        %v472 = vmul.f32 %v351, %v470
        %v473 = vmul.f32 %v352, %v470
        %v474 = vmul.f32 %v353, %v470
        %v478 = vrot.slane %v472, 2
        %v479 = vrot.slane %v473, 2
        %v480 = vsel %vm458, %v478, %v479
        %v481 = vrot.slane %v474, 2
        %v482 = vsel %vm458, %v479, %v481
        %483 = vrot.lane.b32.xlu0 %v480, 124
        %v484 = vpop.permute.xlu0 %483
        %485 = vrot.lane.b32.xlu0 %v482, 124
        %v486 = vpop.permute.xlu0 %485
        %v489 = vadd.f32 %v466, %v484
        %v490 = vadd.f32 %v467, %v486
        %492 = vrot.lane.b32.xlu0 %v349, 8
        %v493 = vpop.permute.xlu0 %492
        %v495 = vmul.f32 %v351, %v493
        %v496 = vmul.f32 %v352, %v493
        %v497 = vmul.f32 %v353, %v493
        %v501 = vrot.slane %v495, 2
        %v502 = vrot.slane %v496, 2
        %v503 = vsel %vm458, %v501, %v502
        %v504 = vrot.slane %v497, 2
        %v505 = vsel %vm458, %v502, %v504
        %506 = vrot.lane.b32.xlu0 %v503, 120
        %v507 = vpop.permute.xlu0 %506
        %508 = vrot.lane.b32.xlu0 %v505, 120
        %v509 = vpop.permute.xlu0 %508
        %v512 = vadd.f32 %v489, %v507
        %v513 = vadd.f32 %v490, %v509
        %v515 = vlaneseq
        %v516 = vshrl.u32 %v515, 7
        %v517 = vsub.s32 0, %v516
        %v518 = vrot.slane %v301, %v517
        %v520 = vmul.f32 %v512, %v518
        %v521 = vmul.f32 %v513, %v518
        %v523 = vlaneseq
        %v524 = vshrl.u32 %v523, 7
        %v525 = vsub.s32 0, %v524
        %v526 = vrot.slane %v302, %v525
        %v528 = vadd.f32 %v520, %v526
        %v529 = vadd.f32 %v521, %v526
        %v530 = vmax.f32 %v528, 0.0
        %v531 = vmax.f32 %v529, 0.0
        %vm532 = vcmask 523264
        %v534 = vsel %vm532, %v530, 0
        %v537 = vsel %vm532, %v531, 0
        %539 = vmatprep.subr.mxu0 0.0
        %540 = vmatpush1.msra.mxu0 0.0
        %541 = vmatprep.subr.mxu0 0.0
        %542 = vmatpush1.msra.mxu0 0.0
        %543 = vmatprep.subr.mxu0 0.0
        %544 = vmatpush1.msra.mxu0 0.0
        %545 = vmatprep.subr.mxu0 0.0
        %546 = vmatpush1.msra.mxu0 0.0
        %547 = vmatprep.subr.mxu0 0.0
        %548 = vmatpush1.msra.mxu0 0.0
        %549 = vmatprep.subr.mxu0 0.0
        %550 = vmatpush1.msra.mxu0 0.0
        %551 = vmatprep.subr.mxu0 0.0
        %552 = vmatpush1.msra.mxu0 0.0
        %553 = vmatprep.subr.mxu0 0.0
        %554 = vmatpush1.msra.mxu0 0.0
        %555 = vmatprep.subr.mxu0 0.0
        %556 = vmatpush1.msra.mxu0 %v300
        %557 = vmatprep.subr.mxu0 0.0
        %558 = vmatpush1.msra.mxu0 %v299
        %559 = vmatprep.subr.mxu0 0.0
        %560 = vmatpush1.msra.mxu0 %v298
        %561 = vmatprep.subr.mxu0 0.0
        %562 = vmatpush1.msra.mxu0 %v297
        %563 = vmatprep.subr.mxu0 0.0
        %564 = vmatpush1.msra.mxu0 %v296
        %565 = vmatprep.subr.mxu0 0.0
        %566 = vmatpush1.msra.mxu0 %v295
        %567 = vmatprep.subr.mxu0 0.0
        %568 = vmatpush1.msra.mxu0 %v294
        %569 = vmatprep.subr.mxu0 0.0
        %570 = vmatpush1.msra.mxu0 %v293
        %571 = vmatprep.subr.mxu0 0.0
        %572 = vmatpush2.msra.mxu0 0.0
        %573 = vmatprep.subr.mxu0 0.0
        %574 = vmatpush2.msra.mxu0 0.0
        %575 = vmatprep.subr.mxu0 0.0
        %576 = vmatpush2.msra.mxu0 0.0
        %577 = vmatprep.subr.mxu0 0.0
        %578 = vmatpush2.msra.mxu0 0.0
        %579 = vmatprep.subr.mxu0 0.0
        %580 = vmatpush2.msra.mxu0 0.0
        %581 = vmatprep.subr.mxu0 0.0
        %582 = vmatpush2.msra.mxu0 0.0
        %583 = vmatprep.subr.mxu0 0.0
        %584 = vmatpush2.msra.mxu0 0.0
        %585 = vmatprep.subr.mxu0 0.0
        %586 = vmatpush2.msra.mxu0 0.0
        %587 = vmatprep.subr.mxu0 0.0
        %588 = vmatpush2.msra.mxu0 0.0
        %589 = vmatprep.subr.mxu0 0.0
        %590 = vmatpush2.msra.mxu0 0.0
        %591 = vmatprep.subr.mxu0 0.0
        %592 = vmatpush2.msra.mxu0 0.0
        %593 = vmatprep.subr.mxu0 0.0
        %594 = vmatpush2.msra.mxu0 0.0
        %595 = vmatprep.subr.mxu0 0.0
        %596 = vmatpush2.msra.mxu0 0.0
        %597 = vmatprep.subr.mxu0 0.0
        %598 = vmatpush2.msra.mxu0 0.0
        %599 = vmatprep.subr.mxu0 0.0
        %600 = vmatpush2.msra.mxu0 0.0
        %601 = vmatprep.subr.mxu0 0.0
        %602 = vmatpush2.msra.mxu0 0.0
        %603 = vmatprep.mubr.f32.mxu0 0.0
        %604 = vmatmul.mubr.f32.gmra.mxu0 %v534
        %v605 = vpop.f32.mrf.mxu0
        %v606 = vadd.f32 0.0, %v605
        %v607 = vpop.f32.mrf.mxu0
        %608 = vmatprep.mubr.f32.mxu0 0.0
        %609 = vmatmul.mubr.f32.gmra.mxu0 %v537
        %v610 = vpop.f32.mrf.mxu0
        %v611 = vadd.f32 0.0, %v610
        %v612 = vpop.f32.mrf.mxu0
        %613 = vdwg.mxu0
        %v615 = vlaneseq
        %v616 = vshrl.u32 %v615, 7
        %v617 = vsub.s32 0, %v616
        %v618 = vrot.slane %v303, %v617
        %v620 = vmul.f32 %v606, %v618
        %v621 = vmul.f32 %v611, %v618
        %v623 = vlaneseq
        %v624 = vshrl.u32 %v623, 7
        %v625 = vsub.s32 0, %v624
        %v626 = vrot.slane %v304, %v625
        %v628 = vadd.f32 %v620, %v626
        %v629 = vadd.f32 %v621, %v626
        %v630 = vmax.f32 %v628, 0.0
        %v631 = vmax.f32 %v629, 0.0
        %632 = vst [vmem:[%s285] sm:$0xff] %v630
        %633 = vst [vmem:[%s285 + $0x8] sm:$0xff] %v631
        %s634 = sand.u32 %s195, 1
        %s635 = scalar_lea.sflag [#allocation3], %s634
        %s636 = sand.u32 %s195, 1
        %s637 = smul.addr %s636, 16
        %s638 = scalar_lea.vmem [#allocation2], %s637
        // Predicated region
        $region49: #{tpu_custom_call.1} parent=47 // pred_check
          %p639 = pneg %p205
        $region50: #{tpu_custom_call.1} parent=47 // pred_check_branch
          %641 = sbr.rel (%p639) target = $region52
        $region51: #{tpu_custom_call.1} parent=47 // pred_region
          %s642 = smul.u32 2, %s26
          %s644 = ssub.s32 256, 256
          %645 = vsyncadd %s635, %s644
          %s646 = smul.addr %s25, 2
          %s647 = sadd.s32 %s642, %s646
          %s648 = smul.addr %s647, 128
          %s649 = scalar_lea.hbm %s7, %s648
          %s650 = sshll.u32 %s638, 4
          %s651 = int_to_ptr.vmem [resolvable:$true] %s650
          %656 = dma.vmem_to_hbm [thread:$0]  %s651, 256, %s649, %s635, 128, 128, 8
        $region52: #{tpu_custom_call.1} parent=47 // pred_fallthru
          _
      $region48: #{tpu_custom_call.1} parent=5 // pred_fallthru
        _
      %p657 = scmp.le.s32.totalorder 2, %s16
      // Predicated region
      $region53: #{tpu_custom_call.1} parent=5 // pred_check
        %p658 = pneg %p657
      $region54: #{tpu_custom_call.1} parent=5 // pred_check_branch
        %660 = sbr.rel (%p658) target = $region56
      $region55: #{tpu_custom_call.1} parent=5 // pred_region
        %s661 = ssub.s32 %s16, 2
        // Predicated region
        $region57: #{tpu_custom_call.1} parent=55 // pred_check
          %p662 = pneg %p211
        $region58: #{tpu_custom_call.1} parent=55 // pred_check_branch
          %664 = sbr.rel (%p662) target = $region60
        $region59: #{tpu_custom_call.1} parent=55 // pred_region
          %s665 = sand.u32 %s196, 1
          %s666 = scalar_lea.sflag [#allocation3], %s665
          %s667 = sand.u32 %s196, 1
          %s668 = smul.addr %s667, 16
          %s669 = scalar_lea.vmem [#allocation2], %s668
          %670 = dma.done %s666, 256
        $region60: #{tpu_custom_call.1} parent=55 // pred_fallthru
          _
      $region56: #{tpu_custom_call.1} parent=5 // pred_fallthru
        _
    $region6: #{tpu_custom_call.1} parent=1 // loop_footer
      %s20 = sadd.s32 1, %s16
    $region7: #{tpu_custom_call.1} parent=1 // loop_footer_branch
      %15 = sbr.rel target = $region3
    $region8: #{tpu_custom_call.1} parent=1 // loop_exit
      _
    %671 = vsyncpa [#allocation3], 1
    %s672 = scalar_lea.sflag [#allocation3], 1
    %673 = vsyncpa %s672, 1

</llo_original>
